<compile_context>
chip_gen: v6e
topology: v6e:2x2x1
jax: 0.10.0
libtpu: 0.0.40
codegen_flags: <defaults>
</compile_context>

<pallas_src>
import functools

import jax
import jax.numpy as jnp
from jax.experimental import pallas as pl
from jax.experimental.pallas import tpu as pltpu


def _gpt_embedding_kernel(*refs, tile_t: int, dropout_prob: float, training: bool):
    use_dropout = training and dropout_prob > 0.0
    if use_dropout:
        (ids_ref, pids_ref, wtab_hbm, ptab_hbm, rand_ref,
         out_ref, wrows, prows, sem) = refs
    else:
        (ids_ref, pids_ref, wtab_hbm, ptab_hbm,
         out_ref, wrows, prows, sem) = refs
        rand_ref = None

    V = wtab_hbm.shape[0]
    C = ptab_hbm.shape[0]
    base = pl.program_id(0) * tile_t

    # ---- row gather: one (D,) row per token, DMA'd HBM -> VMEM scratch ----
    copies = []
    for t in range(tile_t):                      # static unroll; tile_t is small
        wid = ids_ref[base + t]
        wid = jnp.minimum(jnp.maximum(wid, 0), V - 1)    # clamp OOB token ids
        pid = pids_ref[base + t]
        pid = jnp.minimum(jnp.maximum(pid, 0), C - 1)    # clamp OOB positions
        cw = pltpu.make_async_copy(wtab_hbm.at[wid], wrows.at[t], sem.at[0])
        cp = pltpu.make_async_copy(ptab_hbm.at[pid], prows.at[t], sem.at[1])
        cw.start()
        cp.start()
        copies.append(cw)
        copies.append(cp)
    for c in copies:
        c.wait()

    # ---- add on the VPU (+ optional inverted dropout) ----
    y = wrows[...].astype(jnp.float32) + prows[...].astype(jnp.float32)
    if use_dropout:
        keep = rand_ref[...] >= jnp.float32(dropout_prob)
        y = jnp.where(keep, y * (1.0 / (1.0 - dropout_prob)), 0.0)

    out_ref[...] = y.astype(out_ref.dtype)


def gpt_embedding_forward(x, positions, word_table, pos_table, *,
                          dropout_prob=0.1, training=False, rng_key=None,
                          tile_t=8):
    """x: (B, S) int tokens. positions: (1, S) / (B, S) ints, or None -> arange(S)."""
    B, S = x.shape
    V, D = word_table.shape
    C = pos_table.shape[0]

    if positions is None:
        positions = jnp.arange(S, dtype=jnp.int32)[None, :]
    # Flatten in the wrapper; the kernel works on flat lane-dense (tile_t, D) tiles.
    ids_flat = x.reshape(B * S).astype(jnp.int32)
    pos_flat = jnp.broadcast_to(positions.astype(jnp.int32), (B, S)).reshape(B * S)

    T = B * S
    num_tiles = -(-T // tile_t)
    T_pad = num_tiles * tile_t
    if T_pad != T:
        ids_flat = jnp.pad(ids_flat, (0, T_pad - T))
        pos_flat = jnp.pad(pos_flat, (0, T_pad - T))

    use_dropout = training and dropout_prob > 0.0

    tok_spec = pl.BlockSpec((tile_t, D), lambda i, ids, pids: (i, 0))
    in_specs = [
        pl.BlockSpec(memory_space=pl.ANY),   # word table stays in HBM
        pl.BlockSpec(memory_space=pl.ANY),   # pos table stays in HBM
    ]
    operands = [word_table, pos_table]
    if use_dropout:
        if rng_key is None:
            rng_key = jax.random.PRNGKey(0)
        rand = jax.random.uniform(rng_key, (T_pad, D), dtype=jnp.float32)
        in_specs.append(tok_spec)            # per-tile dropout noise
        operands.append(rand)

    kernel = functools.partial(_gpt_embedding_kernel, tile_t=int(tile_t),
                               dropout_prob=float(dropout_prob),
                               training=bool(training))

    out_flat = pl.pallas_call(
        kernel,
        out_shape=jax.ShapeDtypeStruct((T_pad, D), jnp.float32),
        grid_spec=pltpu.PrefetchScalarGridSpec(
            num_scalar_prefetch=2,            # ids_flat, pos_flat -> SMEM
            grid=(num_tiles,),
            in_specs=in_specs,
            out_specs=tok_spec,
            scratch_shapes=[
                pltpu.VMEM((tile_t, D), word_table.dtype),   # gathered word rows
                pltpu.VMEM((tile_t, D), pos_table.dtype),    # gathered pos rows
                pltpu.SemaphoreType.DMA((2,)),
            ]),
        compiler_params=pltpu.CompilerParams(
            dimension_semantics=("parallel",)),               # megacore on v7x
    )(ids_flat, pos_flat, *operands)

    return out_flat[:T].reshape(B, S, D)


if __name__ == "__main__":
    # Small shapes consistent with the module's forward.
    B, S = 2, 8
    VOCAB, DMODEL, CTX = 256, 128, 64
    DROPOUT = 0.1
    TILE_T = 8                                  # 2 token tiles over B*S = 16

    key = jax.random.PRNGKey(0)
    k_w, k_p, k_tok, k_drop = jax.random.split(key, 4)
    word_table = jax.random.normal(k_w, (VOCAB, DMODEL), dtype=jnp.float32)
    pos_table = jax.random.normal(k_p, (CTX, DMODEL), dtype=jnp.float32)
    x = jax.random.randint(k_tok, (B, S), 0, VOCAB, dtype=jnp.int32)

    # Eval-mode forward (dropout = identity) vs pure-JAX reference.
    out = gpt_embedding_forward(x, None, word_table, pos_table,
                                dropout_prob=DROPOUT, training=False,
                                tile_t=TILE_T)
    out = jax.block_until_ready(out)
    ref = word_table[x] + pos_table[jnp.arange(S)][None, :, :]
    assert out.shape == (B, S, DMODEL) and out.dtype == jnp.float32
    assert jnp.allclose(out, ref, atol=1e-5, rtol=1e-5), "mismatch vs reference"

    # Training-mode forward: every element is either dropped (0) or scaled by 1/(1-p).
    out_train = gpt_embedding_forward(x, None, word_table, pos_table,
                                      dropout_prob=DROPOUT, training=True,
                                      rng_key=k_drop, tile_t=TILE_T)
    out_train = jax.block_until_ready(out_train)
    scaled = ref / (1.0 - DROPOUT)
    ok = jnp.all((out_train == 0.0) | (jnp.abs(out_train - scaled) < 1e-4))
    assert out_train.shape == (B, S, DMODEL) and bool(ok), "bad dropout output"

    print("KERNEL_OK")
</pallas_src>

<mosaic_0001>
module attributes {stable_mosaic.version = 11 : i64} {
  func.func @_gpt_embedding_kernel(%arg0: i32, %arg1: memref<16xi32, #tpu.memory_space<smem>>, %arg2: memref<16xi32, #tpu.memory_space<smem>>, %arg3: memref<256x128xf32, #tpu.memory_space<any>>, %arg4: memref<64x128xf32, #tpu.memory_space<any>>, %arg5: memref<8x128xf32, #tpu.memory_space<vmem>>, %arg6: memref<8x128xf32, #tpu.memory_space<vmem>>, %arg7: memref<8x128xf32, #tpu.memory_space<vmem>>, %arg8: memref<2x!tpu.dma_semaphore, #tpu.memory_space<semaphore_mem>>) attributes {dimension_semantics = [#tpu.dimension_semantics<parallel>], iteration_bounds = array<i64: 2>, scalar_prefetch = 2 : i64, scratch_operands = 3 : i64, tpu.core_type = #tpu.core_type<tc>, window_params = [{}, {}, {transform_indices = @transform_2, window_bounds = array<i64: 8, 128>}]} {
    %c8_i32 = arith.constant 8 : i32
    %0 = arith.muli %arg0, %c8_i32 : i32
    %c0_i32 = arith.constant 0 : i32
    %1 = arith.addi %0, %c0_i32 : i32
    %2 = arith.index_cast %1 : i32 to index
    %3 = memref.load %arg1[%2] : memref<16xi32, #tpu.memory_space<smem>>
    %c0_i32_0 = arith.constant 0 : i32
    %4 = arith.maxsi %3, %c0_i32_0 : i32
    %c255_i32 = arith.constant 255 : i32
    %5 = arith.minsi %4, %c255_i32 : i32
    %c0_i32_1 = arith.constant 0 : i32
    %6 = arith.addi %0, %c0_i32_1 : i32
    %7 = arith.index_cast %6 : i32 to index
    %8 = memref.load %arg2[%7] : memref<16xi32, #tpu.memory_space<smem>>
    %c0_i32_2 = arith.constant 0 : i32
    %9 = arith.maxsi %8, %c0_i32_2 : i32
    %c63_i32 = arith.constant 63 : i32
    %10 = arith.minsi %9, %c63_i32 : i32
    %c0_i32_3 = arith.constant 0 : i32
    %c0_i32_4 = arith.constant 0 : i32
    %c0_i32_5 = arith.constant 0 : i32
    %11 = tpu.memref_slice %arg3[%5, %c0_i32_5] : memref<256x128xf32, #tpu.memory_space<any>> -> memref<1x128xf32, #tpu.memory_space<any>>
    %12 = tpu.memref_squeeze %11 : memref<1x128xf32, #tpu.memory_space<any>> -> memref<128xf32, #tpu.memory_space<any>>
    %c0_i32_6 = arith.constant 0 : i32
    %13 = tpu.memref_slice %arg6[%c0_i32_3, %c0_i32_6] : memref<8x128xf32, #tpu.memory_space<vmem>> -> memref<1x128xf32, #tpu.memory_space<vmem>>
    %14 = tpu.memref_squeeze %13 : memref<1x128xf32, #tpu.memory_space<vmem>> -> memref<128xf32, #tpu.memory_space<vmem>>
    %15 = tpu.memref_slice %arg8[%c0_i32_4] : memref<2x!tpu.dma_semaphore, #tpu.memory_space<semaphore_mem>> -> memref<1x!tpu.dma_semaphore, #tpu.memory_space<semaphore_mem>>
    %16 = tpu.memref_squeeze %15 : memref<1x!tpu.dma_semaphore, #tpu.memory_space<semaphore_mem>> -> memref<!tpu.dma_semaphore, #tpu.memory_space<semaphore_mem>>
    tpu.enqueue_dma source(%12 : memref<128xf32, #tpu.memory_space<any>>) target(%14 : memref<128xf32, #tpu.memory_space<vmem>>) target_semaphore(%16 : memref<!tpu.dma_semaphore, #tpu.memory_space<semaphore_mem>>)
    %c0_i32_7 = arith.constant 0 : i32
    %c1_i32 = arith.constant 1 : i32
    %c0_i32_8 = arith.constant 0 : i32
    %17 = tpu.memref_slice %arg4[%10, %c0_i32_8] : memref<64x128xf32, #tpu.memory_space<any>> -> memref<1x128xf32, #tpu.memory_space<any>>
    %18 = tpu.memref_squeeze %17 : memref<1x128xf32, #tpu.memory_space<any>> -> memref<128xf32, #tpu.memory_space<any>>
    %c0_i32_9 = arith.constant 0 : i32
    %19 = tpu.memref_slice %arg7[%c0_i32_7, %c0_i32_9] : memref<8x128xf32, #tpu.memory_space<vmem>> -> memref<1x128xf32, #tpu.memory_space<vmem>>
    %20 = tpu.memref_squeeze %19 : memref<1x128xf32, #tpu.memory_space<vmem>> -> memref<128xf32, #tpu.memory_space<vmem>>
    %21 = tpu.memref_slice %arg8[%c1_i32] : memref<2x!tpu.dma_semaphore, #tpu.memory_space<semaphore_mem>> -> memref<1x!tpu.dma_semaphore, #tpu.memory_space<semaphore_mem>>
    %22 = tpu.memref_squeeze %21 : memref<1x!tpu.dma_semaphore, #tpu.memory_space<semaphore_mem>> -> memref<!tpu.dma_semaphore, #tpu.memory_space<semaphore_mem>>
    tpu.enqueue_dma source(%18 : memref<128xf32, #tpu.memory_space<any>>) target(%20 : memref<128xf32, #tpu.memory_space<vmem>>) target_semaphore(%22 : memref<!tpu.dma_semaphore, #tpu.memory_space<semaphore_mem>>)
    %c1_i32_10 = arith.constant 1 : i32
    %23 = arith.addi %0, %c1_i32_10 : i32
    %24 = arith.index_cast %23 : i32 to index
    %25 = memref.load %arg1[%24] : memref<16xi32, #tpu.memory_space<smem>>
    %c0_i32_11 = arith.constant 0 : i32
    %26 = arith.maxsi %25, %c0_i32_11 : i32
    %c255_i32_12 = arith.constant 255 : i32
    %27 = arith.minsi %26, %c255_i32_12 : i32
    %c1_i32_13 = arith.constant 1 : i32
    %28 = arith.addi %0, %c1_i32_13 : i32
    %29 = arith.index_cast %28 : i32 to index
    %30 = memref.load %arg2[%29] : memref<16xi32, #tpu.memory_space<smem>>
    %c0_i32_14 = arith.constant 0 : i32
    %31 = arith.maxsi %30, %c0_i32_14 : i32
    %c63_i32_15 = arith.constant 63 : i32
    %32 = arith.minsi %31, %c63_i32_15 : i32
    %c1_i32_16 = arith.constant 1 : i32
    %c0_i32_17 = arith.constant 0 : i32
    %c0_i32_18 = arith.constant 0 : i32
    %33 = tpu.memref_slice %arg3[%27, %c0_i32_18] : memref<256x128xf32, #tpu.memory_space<any>> -> memref<1x128xf32, #tpu.memory_space<any>>
    %34 = tpu.memref_squeeze %33 : memref<1x128xf32, #tpu.memory_space<any>> -> memref<128xf32, #tpu.memory_space<any>>
    %c0_i32_19 = arith.constant 0 : i32
    %35 = tpu.memref_slice %arg6[%c1_i32_16, %c0_i32_19] : memref<8x128xf32, #tpu.memory_space<vmem>> -> memref<1x128xf32, #tpu.memory_space<vmem>>
    %36 = tpu.memref_squeeze %35 : memref<1x128xf32, #tpu.memory_space<vmem>> -> memref<128xf32, #tpu.memory_space<vmem>>
    %37 = tpu.memref_slice %arg8[%c0_i32_17] : memref<2x!tpu.dma_semaphore, #tpu.memory_space<semaphore_mem>> -> memref<1x!tpu.dma_semaphore, #tpu.memory_space<semaphore_mem>>
    %38 = tpu.memref_squeeze %37 : memref<1x!tpu.dma_semaphore, #tpu.memory_space<semaphore_mem>> -> memref<!tpu.dma_semaphore, #tpu.memory_space<semaphore_mem>>
    tpu.enqueue_dma source(%34 : memref<128xf32, #tpu.memory_space<any>>) target(%36 : memref<128xf32, #tpu.memory_space<vmem>>) target_semaphore(%38 : memref<!tpu.dma_semaphore, #tpu.memory_space<semaphore_mem>>)
    %c1_i32_20 = arith.constant 1 : i32
    %c1_i32_21 = arith.constant 1 : i32
    %c0_i32_22 = arith.constant 0 : i32
    %39 = tpu.memref_slice %arg4[%32, %c0_i32_22] : memref<64x128xf32, #tpu.memory_space<any>> -> memref<1x128xf32, #tpu.memory_space<any>>
    %40 = tpu.memref_squeeze %39 : memref<1x128xf32, #tpu.memory_space<any>> -> memref<128xf32, #tpu.memory_space<any>>
    %c0_i32_23 = arith.constant 0 : i32
    %41 = tpu.memref_slice %arg7[%c1_i32_20, %c0_i32_23] : memref<8x128xf32, #tpu.memory_space<vmem>> -> memref<1x128xf32, #tpu.memory_space<vmem>>
    %42 = tpu.memref_squeeze %41 : memref<1x128xf32, #tpu.memory_space<vmem>> -> memref<128xf32, #tpu.memory_space<vmem>>
    %43 = tpu.memref_slice %arg8[%c1_i32_21] : memref<2x!tpu.dma_semaphore, #tpu.memory_space<semaphore_mem>> -> memref<1x!tpu.dma_semaphore, #tpu.memory_space<semaphore_mem>>
    %44 = tpu.memref_squeeze %43 : memref<1x!tpu.dma_semaphore, #tpu.memory_space<semaphore_mem>> -> memref<!tpu.dma_semaphore, #tpu.memory_space<semaphore_mem>>
    tpu.enqueue_dma source(%40 : memref<128xf32, #tpu.memory_space<any>>) target(%42 : memref<128xf32, #tpu.memory_space<vmem>>) target_semaphore(%44 : memref<!tpu.dma_semaphore, #tpu.memory_space<semaphore_mem>>)
    %c2_i32 = arith.constant 2 : i32
    %45 = arith.addi %0, %c2_i32 : i32
    %46 = arith.index_cast %45 : i32 to index
    %47 = memref.load %arg1[%46] : memref<16xi32, #tpu.memory_space<smem>>
    %c0_i32_24 = arith.constant 0 : i32
    %48 = arith.maxsi %47, %c0_i32_24 : i32
    %c255_i32_25 = arith.constant 255 : i32
    %49 = arith.minsi %48, %c255_i32_25 : i32
    %c2_i32_26 = arith.constant 2 : i32
    %50 = arith.addi %0, %c2_i32_26 : i32
    %51 = arith.index_cast %50 : i32 to index
    %52 = memref.load %arg2[%51] : memref<16xi32, #tpu.memory_space<smem>>
    %c0_i32_27 = arith.constant 0 : i32
    %53 = arith.maxsi %52, %c0_i32_27 : i32
    %c63_i32_28 = arith.constant 63 : i32
    %54 = arith.minsi %53, %c63_i32_28 : i32
    %c2_i32_29 = arith.constant 2 : i32
    %c0_i32_30 = arith.constant 0 : i32
    %c0_i32_31 = arith.constant 0 : i32
    %55 = tpu.memref_slice %arg3[%49, %c0_i32_31] : memref<256x128xf32, #tpu.memory_space<any>> -> memref<1x128xf32, #tpu.memory_space<any>>
    %56 = tpu.memref_squeeze %55 : memref<1x128xf32, #tpu.memory_space<any>> -> memref<128xf32, #tpu.memory_space<any>>
    %c0_i32_32 = arith.constant 0 : i32
    %57 = tpu.memref_slice %arg6[%c2_i32_29, %c0_i32_32] : memref<8x128xf32, #tpu.memory_space<vmem>> -> memref<1x128xf32, #tpu.memory_space<vmem>>
    %58 = tpu.memref_squeeze %57 : memref<1x128xf32, #tpu.memory_space<vmem>> -> memref<128xf32, #tpu.memory_space<vmem>>
    %59 = tpu.memref_slice %arg8[%c0_i32_30] : memref<2x!tpu.dma_semaphore, #tpu.memory_space<semaphore_mem>> -> memref<1x!tpu.dma_semaphore, #tpu.memory_space<semaphore_mem>>
    %60 = tpu.memref_squeeze %59 : memref<1x!tpu.dma_semaphore, #tpu.memory_space<semaphore_mem>> -> memref<!tpu.dma_semaphore, #tpu.memory_space<semaphore_mem>>
    tpu.enqueue_dma source(%56 : memref<128xf32, #tpu.memory_space<any>>) target(%58 : memref<128xf32, #tpu.memory_space<vmem>>) target_semaphore(%60 : memref<!tpu.dma_semaphore, #tpu.memory_space<semaphore_mem>>)
    %c2_i32_33 = arith.constant 2 : i32
    %c1_i32_34 = arith.constant 1 : i32
    %c0_i32_35 = arith.constant 0 : i32
    %61 = tpu.memref_slice %arg4[%54, %c0_i32_35] : memref<64x128xf32, #tpu.memory_space<any>> -> memref<1x128xf32, #tpu.memory_space<any>>
    %62 = tpu.memref_squeeze %61 : memref<1x128xf32, #tpu.memory_space<any>> -> memref<128xf32, #tpu.memory_space<any>>
    %c0_i32_36 = arith.constant 0 : i32
    %63 = tpu.memref_slice %arg7[%c2_i32_33, %c0_i32_36] : memref<8x128xf32, #tpu.memory_space<vmem>> -> memref<1x128xf32, #tpu.memory_space<vmem>>
    %64 = tpu.memref_squeeze %63 : memref<1x128xf32, #tpu.memory_space<vmem>> -> memref<128xf32, #tpu.memory_space<vmem>>
    %65 = tpu.memref_slice %arg8[%c1_i32_34] : memref<2x!tpu.dma_semaphore, #tpu.memory_space<semaphore_mem>> -> memref<1x!tpu.dma_semaphore, #tpu.memory_space<semaphore_mem>>
    %66 = tpu.memref_squeeze %65 : memref<1x!tpu.dma_semaphore, #tpu.memory_space<semaphore_mem>> -> memref<!tpu.dma_semaphore, #tpu.memory_space<semaphore_mem>>
    tpu.enqueue_dma source(%62 : memref<128xf32, #tpu.memory_space<any>>) target(%64 : memref<128xf32, #tpu.memory_space<vmem>>) target_semaphore(%66 : memref<!tpu.dma_semaphore, #tpu.memory_space<semaphore_mem>>)
    %c3_i32 = arith.constant 3 : i32
    %67 = arith.addi %0, %c3_i32 : i32
    %68 = arith.index_cast %67 : i32 to index
    %69 = memref.load %arg1[%68] : memref<16xi32, #tpu.memory_space<smem>>
    %c0_i32_37 = arith.constant 0 : i32
    %70 = arith.maxsi %69, %c0_i32_37 : i32
    %c255_i32_38 = arith.constant 255 : i32
    %71 = arith.minsi %70, %c255_i32_38 : i32
    %c3_i32_39 = arith.constant 3 : i32
    %72 = arith.addi %0, %c3_i32_39 : i32
    %73 = arith.index_cast %72 : i32 to index
    %74 = memref.load %arg2[%73] : memref<16xi32, #tpu.memory_space<smem>>
    %c0_i32_40 = arith.constant 0 : i32
    %75 = arith.maxsi %74, %c0_i32_40 : i32
    %c63_i32_41 = arith.constant 63 : i32
    %76 = arith.minsi %75, %c63_i32_41 : i32
    %c3_i32_42 = arith.constant 3 : i32
    %c0_i32_43 = arith.constant 0 : i32
    %c0_i32_44 = arith.constant 0 : i32
    %77 = tpu.memref_slice %arg3[%71, %c0_i32_44] : memref<256x128xf32, #tpu.memory_space<any>> -> memref<1x128xf32, #tpu.memory_space<any>>
    %78 = tpu.memref_squeeze %77 : memref<1x128xf32, #tpu.memory_space<any>> -> memref<128xf32, #tpu.memory_space<any>>
    %c0_i32_45 = arith.constant 0 : i32
    %79 = tpu.memref_slice %arg6[%c3_i32_42, %c0_i32_45] : memref<8x128xf32, #tpu.memory_space<vmem>> -> memref<1x128xf32, #tpu.memory_space<vmem>>
    %80 = tpu.memref_squeeze %79 : memref<1x128xf32, #tpu.memory_space<vmem>> -> memref<128xf32, #tpu.memory_space<vmem>>
    %81 = tpu.memref_slice %arg8[%c0_i32_43] : memref<2x!tpu.dma_semaphore, #tpu.memory_space<semaphore_mem>> -> memref<1x!tpu.dma_semaphore, #tpu.memory_space<semaphore_mem>>
    %82 = tpu.memref_squeeze %81 : memref<1x!tpu.dma_semaphore, #tpu.memory_space<semaphore_mem>> -> memref<!tpu.dma_semaphore, #tpu.memory_space<semaphore_mem>>
    tpu.enqueue_dma source(%78 : memref<128xf32, #tpu.memory_space<any>>) target(%80 : memref<128xf32, #tpu.memory_space<vmem>>) target_semaphore(%82 : memref<!tpu.dma_semaphore, #tpu.memory_space<semaphore_mem>>)
    %c3_i32_46 = arith.constant 3 : i32
    %c1_i32_47 = arith.constant 1 : i32
    %c0_i32_48 = arith.constant 0 : i32
    %83 = tpu.memref_slice %arg4[%76, %c0_i32_48] : memref<64x128xf32, #tpu.memory_space<any>> -> memref<1x128xf32, #tpu.memory_space<any>>
    %84 = tpu.memref_squeeze %83 : memref<1x128xf32, #tpu.memory_space<any>> -> memref<128xf32, #tpu.memory_space<any>>
    %c0_i32_49 = arith.constant 0 : i32
    %85 = tpu.memref_slice %arg7[%c3_i32_46, %c0_i32_49] : memref<8x128xf32, #tpu.memory_space<vmem>> -> memref<1x128xf32, #tpu.memory_space<vmem>>
    %86 = tpu.memref_squeeze %85 : memref<1x128xf32, #tpu.memory_space<vmem>> -> memref<128xf32, #tpu.memory_space<vmem>>
    %87 = tpu.memref_slice %arg8[%c1_i32_47] : memref<2x!tpu.dma_semaphore, #tpu.memory_space<semaphore_mem>> -> memref<1x!tpu.dma_semaphore, #tpu.memory_space<semaphore_mem>>
    %88 = tpu.memref_squeeze %87 : memref<1x!tpu.dma_semaphore, #tpu.memory_space<semaphore_mem>> -> memref<!tpu.dma_semaphore, #tpu.memory_space<semaphore_mem>>
    tpu.enqueue_dma source(%84 : memref<128xf32, #tpu.memory_space<any>>) target(%86 : memref<128xf32, #tpu.memory_space<vmem>>) target_semaphore(%88 : memref<!tpu.dma_semaphore, #tpu.memory_space<semaphore_mem>>)
    %c4_i32 = arith.constant 4 : i32
    %89 = arith.addi %0, %c4_i32 : i32
    %90 = arith.index_cast %89 : i32 to index
    %91 = memref.load %arg1[%90] : memref<16xi32, #tpu.memory_space<smem>>
    %c0_i32_50 = arith.constant 0 : i32
    %92 = arith.maxsi %91, %c0_i32_50 : i32
    %c255_i32_51 = arith.constant 255 : i32
    %93 = arith.minsi %92, %c255_i32_51 : i32
    %c4_i32_52 = arith.constant 4 : i32
    %94 = arith.addi %0, %c4_i32_52 : i32
    %95 = arith.index_cast %94 : i32 to index
    %96 = memref.load %arg2[%95] : memref<16xi32, #tpu.memory_space<smem>>
    %c0_i32_53 = arith.constant 0 : i32
    %97 = arith.maxsi %96, %c0_i32_53 : i32
    %c63_i32_54 = arith.constant 63 : i32
    %98 = arith.minsi %97, %c63_i32_54 : i32
    %c4_i32_55 = arith.constant 4 : i32
    %c0_i32_56 = arith.constant 0 : i32
    %c0_i32_57 = arith.constant 0 : i32
    %99 = tpu.memref_slice %arg3[%93, %c0_i32_57] : memref<256x128xf32, #tpu.memory_space<any>> -> memref<1x128xf32, #tpu.memory_space<any>>
    %100 = tpu.memref_squeeze %99 : memref<1x128xf32, #tpu.memory_space<any>> -> memref<128xf32, #tpu.memory_space<any>>
    %c0_i32_58 = arith.constant 0 : i32
    %101 = tpu.memref_slice %arg6[%c4_i32_55, %c0_i32_58] : memref<8x128xf32, #tpu.memory_space<vmem>> -> memref<1x128xf32, #tpu.memory_space<vmem>>
    %102 = tpu.memref_squeeze %101 : memref<1x128xf32, #tpu.memory_space<vmem>> -> memref<128xf32, #tpu.memory_space<vmem>>
    %103 = tpu.memref_slice %arg8[%c0_i32_56] : memref<2x!tpu.dma_semaphore, #tpu.memory_space<semaphore_mem>> -> memref<1x!tpu.dma_semaphore, #tpu.memory_space<semaphore_mem>>
    %104 = tpu.memref_squeeze %103 : memref<1x!tpu.dma_semaphore, #tpu.memory_space<semaphore_mem>> -> memref<!tpu.dma_semaphore, #tpu.memory_space<semaphore_mem>>
    tpu.enqueue_dma source(%100 : memref<128xf32, #tpu.memory_space<any>>) target(%102 : memref<128xf32, #tpu.memory_space<vmem>>) target_semaphore(%104 : memref<!tpu.dma_semaphore, #tpu.memory_space<semaphore_mem>>)
    %c4_i32_59 = arith.constant 4 : i32
    %c1_i32_60 = arith.constant 1 : i32
    %c0_i32_61 = arith.constant 0 : i32
    %105 = tpu.memref_slice %arg4[%98, %c0_i32_61] : memref<64x128xf32, #tpu.memory_space<any>> -> memref<1x128xf32, #tpu.memory_space<any>>
    %106 = tpu.memref_squeeze %105 : memref<1x128xf32, #tpu.memory_space<any>> -> memref<128xf32, #tpu.memory_space<any>>
    %c0_i32_62 = arith.constant 0 : i32
    %107 = tpu.memref_slice %arg7[%c4_i32_59, %c0_i32_62] : memref<8x128xf32, #tpu.memory_space<vmem>> -> memref<1x128xf32, #tpu.memory_space<vmem>>
    %108 = tpu.memref_squeeze %107 : memref<1x128xf32, #tpu.memory_space<vmem>> -> memref<128xf32, #tpu.memory_space<vmem>>
    %109 = tpu.memref_slice %arg8[%c1_i32_60] : memref<2x!tpu.dma_semaphore, #tpu.memory_space<semaphore_mem>> -> memref<1x!tpu.dma_semaphore, #tpu.memory_space<semaphore_mem>>
    %110 = tpu.memref_squeeze %109 : memref<1x!tpu.dma_semaphore, #tpu.memory_space<semaphore_mem>> -> memref<!tpu.dma_semaphore, #tpu.memory_space<semaphore_mem>>
    tpu.enqueue_dma source(%106 : memref<128xf32, #tpu.memory_space<any>>) target(%108 : memref<128xf32, #tpu.memory_space<vmem>>) target_semaphore(%110 : memref<!tpu.dma_semaphore, #tpu.memory_space<semaphore_mem>>)
    %c5_i32 = arith.constant 5 : i32
    %111 = arith.addi %0, %c5_i32 : i32
    %112 = arith.index_cast %111 : i32 to index
    %113 = memref.load %arg1[%112] : memref<16xi32, #tpu.memory_space<smem>>
    %c0_i32_63 = arith.constant 0 : i32
    %114 = arith.maxsi %113, %c0_i32_63 : i32
    %c255_i32_64 = arith.constant 255 : i32
    %115 = arith.minsi %114, %c255_i32_64 : i32
    %c5_i32_65 = arith.constant 5 : i32
    %116 = arith.addi %0, %c5_i32_65 : i32
    %117 = arith.index_cast %116 : i32 to index
    %118 = memref.load %arg2[%117] : memref<16xi32, #tpu.memory_space<smem>>
    %c0_i32_66 = arith.constant 0 : i32
    %119 = arith.maxsi %118, %c0_i32_66 : i32
    %c63_i32_67 = arith.constant 63 : i32
    %120 = arith.minsi %119, %c63_i32_67 : i32
    %c5_i32_68 = arith.constant 5 : i32
    %c0_i32_69 = arith.constant 0 : i32
    %c0_i32_70 = arith.constant 0 : i32
    %121 = tpu.memref_slice %arg3[%115, %c0_i32_70] : memref<256x128xf32, #tpu.memory_space<any>> -> memref<1x128xf32, #tpu.memory_space<any>>
    %122 = tpu.memref_squeeze %121 : memref<1x128xf32, #tpu.memory_space<any>> -> memref<128xf32, #tpu.memory_space<any>>
    %c0_i32_71 = arith.constant 0 : i32
    %123 = tpu.memref_slice %arg6[%c5_i32_68, %c0_i32_71] : memref<8x128xf32, #tpu.memory_space<vmem>> -> memref<1x128xf32, #tpu.memory_space<vmem>>
    %124 = tpu.memref_squeeze %123 : memref<1x128xf32, #tpu.memory_space<vmem>> -> memref<128xf32, #tpu.memory_space<vmem>>
    %125 = tpu.memref_slice %arg8[%c0_i32_69] : memref<2x!tpu.dma_semaphore, #tpu.memory_space<semaphore_mem>> -> memref<1x!tpu.dma_semaphore, #tpu.memory_space<semaphore_mem>>
    %126 = tpu.memref_squeeze %125 : memref<1x!tpu.dma_semaphore, #tpu.memory_space<semaphore_mem>> -> memref<!tpu.dma_semaphore, #tpu.memory_space<semaphore_mem>>
    tpu.enqueue_dma source(%122 : memref<128xf32, #tpu.memory_space<any>>) target(%124 : memref<128xf32, #tpu.memory_space<vmem>>) target_semaphore(%126 : memref<!tpu.dma_semaphore, #tpu.memory_space<semaphore_mem>>)
    %c5_i32_72 = arith.constant 5 : i32
    %c1_i32_73 = arith.constant 1 : i32
    %c0_i32_74 = arith.constant 0 : i32
    %127 = tpu.memref_slice %arg4[%120, %c0_i32_74] : memref<64x128xf32, #tpu.memory_space<any>> -> memref<1x128xf32, #tpu.memory_space<any>>
    %128 = tpu.memref_squeeze %127 : memref<1x128xf32, #tpu.memory_space<any>> -> memref<128xf32, #tpu.memory_space<any>>
    %c0_i32_75 = arith.constant 0 : i32
    %129 = tpu.memref_slice %arg7[%c5_i32_72, %c0_i32_75] : memref<8x128xf32, #tpu.memory_space<vmem>> -> memref<1x128xf32, #tpu.memory_space<vmem>>
    %130 = tpu.memref_squeeze %129 : memref<1x128xf32, #tpu.memory_space<vmem>> -> memref<128xf32, #tpu.memory_space<vmem>>
    %131 = tpu.memref_slice %arg8[%c1_i32_73] : memref<2x!tpu.dma_semaphore, #tpu.memory_space<semaphore_mem>> -> memref<1x!tpu.dma_semaphore, #tpu.memory_space<semaphore_mem>>
    %132 = tpu.memref_squeeze %131 : memref<1x!tpu.dma_semaphore, #tpu.memory_space<semaphore_mem>> -> memref<!tpu.dma_semaphore, #tpu.memory_space<semaphore_mem>>
    tpu.enqueue_dma source(%128 : memref<128xf32, #tpu.memory_space<any>>) target(%130 : memref<128xf32, #tpu.memory_space<vmem>>) target_semaphore(%132 : memref<!tpu.dma_semaphore, #tpu.memory_space<semaphore_mem>>)
    %c6_i32 = arith.constant 6 : i32
    %133 = arith.addi %0, %c6_i32 : i32
    %134 = arith.index_cast %133 : i32 to index
    %135 = memref.load %arg1[%134] : memref<16xi32, #tpu.memory_space<smem>>
    %c0_i32_76 = arith.constant 0 : i32
    %136 = arith.maxsi %135, %c0_i32_76 : i32
    %c255_i32_77 = arith.constant 255 : i32
    %137 = arith.minsi %136, %c255_i32_77 : i32
    %c6_i32_78 = arith.constant 6 : i32
    %138 = arith.addi %0, %c6_i32_78 : i32
    %139 = arith.index_cast %138 : i32 to index
    %140 = memref.load %arg2[%139] : memref<16xi32, #tpu.memory_space<smem>>
    %c0_i32_79 = arith.constant 0 : i32
    %141 = arith.maxsi %140, %c0_i32_79 : i32
    %c63_i32_80 = arith.constant 63 : i32
    %142 = arith.minsi %141, %c63_i32_80 : i32
    %c6_i32_81 = arith.constant 6 : i32
    %c0_i32_82 = arith.constant 0 : i32
    %c0_i32_83 = arith.constant 0 : i32
    %143 = tpu.memref_slice %arg3[%137, %c0_i32_83] : memref<256x128xf32, #tpu.memory_space<any>> -> memref<1x128xf32, #tpu.memory_space<any>>
    %144 = tpu.memref_squeeze %143 : memref<1x128xf32, #tpu.memory_space<any>> -> memref<128xf32, #tpu.memory_space<any>>
    %c0_i32_84 = arith.constant 0 : i32
    %145 = tpu.memref_slice %arg6[%c6_i32_81, %c0_i32_84] : memref<8x128xf32, #tpu.memory_space<vmem>> -> memref<1x128xf32, #tpu.memory_space<vmem>>
    %146 = tpu.memref_squeeze %145 : memref<1x128xf32, #tpu.memory_space<vmem>> -> memref<128xf32, #tpu.memory_space<vmem>>
    %147 = tpu.memref_slice %arg8[%c0_i32_82] : memref<2x!tpu.dma_semaphore, #tpu.memory_space<semaphore_mem>> -> memref<1x!tpu.dma_semaphore, #tpu.memory_space<semaphore_mem>>
    %148 = tpu.memref_squeeze %147 : memref<1x!tpu.dma_semaphore, #tpu.memory_space<semaphore_mem>> -> memref<!tpu.dma_semaphore, #tpu.memory_space<semaphore_mem>>
    tpu.enqueue_dma source(%144 : memref<128xf32, #tpu.memory_space<any>>) target(%146 : memref<128xf32, #tpu.memory_space<vmem>>) target_semaphore(%148 : memref<!tpu.dma_semaphore, #tpu.memory_space<semaphore_mem>>)
    %c6_i32_85 = arith.constant 6 : i32
    %c1_i32_86 = arith.constant 1 : i32
    %c0_i32_87 = arith.constant 0 : i32
    %149 = tpu.memref_slice %arg4[%142, %c0_i32_87] : memref<64x128xf32, #tpu.memory_space<any>> -> memref<1x128xf32, #tpu.memory_space<any>>
    %150 = tpu.memref_squeeze %149 : memref<1x128xf32, #tpu.memory_space<any>> -> memref<128xf32, #tpu.memory_space<any>>
    %c0_i32_88 = arith.constant 0 : i32
    %151 = tpu.memref_slice %arg7[%c6_i32_85, %c0_i32_88] : memref<8x128xf32, #tpu.memory_space<vmem>> -> memref<1x128xf32, #tpu.memory_space<vmem>>
    %152 = tpu.memref_squeeze %151 : memref<1x128xf32, #tpu.memory_space<vmem>> -> memref<128xf32, #tpu.memory_space<vmem>>
    %153 = tpu.memref_slice %arg8[%c1_i32_86] : memref<2x!tpu.dma_semaphore, #tpu.memory_space<semaphore_mem>> -> memref<1x!tpu.dma_semaphore, #tpu.memory_space<semaphore_mem>>
    %154 = tpu.memref_squeeze %153 : memref<1x!tpu.dma_semaphore, #tpu.memory_space<semaphore_mem>> -> memref<!tpu.dma_semaphore, #tpu.memory_space<semaphore_mem>>
    tpu.enqueue_dma source(%150 : memref<128xf32, #tpu.memory_space<any>>) target(%152 : memref<128xf32, #tpu.memory_space<vmem>>) target_semaphore(%154 : memref<!tpu.dma_semaphore, #tpu.memory_space<semaphore_mem>>)
    %c7_i32 = arith.constant 7 : i32
    %155 = arith.addi %0, %c7_i32 : i32
    %156 = arith.index_cast %155 : i32 to index
    %157 = memref.load %arg1[%156] : memref<16xi32, #tpu.memory_space<smem>>
    %c0_i32_89 = arith.constant 0 : i32
    %158 = arith.maxsi %157, %c0_i32_89 : i32
    %c255_i32_90 = arith.constant 255 : i32
    %159 = arith.minsi %158, %c255_i32_90 : i32
    %c7_i32_91 = arith.constant 7 : i32
    %160 = arith.addi %0, %c7_i32_91 : i32
    %161 = arith.index_cast %160 : i32 to index
    %162 = memref.load %arg2[%161] : memref<16xi32, #tpu.memory_space<smem>>
    %c0_i32_92 = arith.constant 0 : i32
    %163 = arith.maxsi %162, %c0_i32_92 : i32
    %c63_i32_93 = arith.constant 63 : i32
    %164 = arith.minsi %163, %c63_i32_93 : i32
    %c7_i32_94 = arith.constant 7 : i32
    %c0_i32_95 = arith.constant 0 : i32
    %c0_i32_96 = arith.constant 0 : i32
    %165 = tpu.memref_slice %arg3[%159, %c0_i32_96] : memref<256x128xf32, #tpu.memory_space<any>> -> memref<1x128xf32, #tpu.memory_space<any>>
    %166 = tpu.memref_squeeze %165 : memref<1x128xf32, #tpu.memory_space<any>> -> memref<128xf32, #tpu.memory_space<any>>
    %c0_i32_97 = arith.constant 0 : i32
    %167 = tpu.memref_slice %arg6[%c7_i32_94, %c0_i32_97] : memref<8x128xf32, #tpu.memory_space<vmem>> -> memref<1x128xf32, #tpu.memory_space<vmem>>
    %168 = tpu.memref_squeeze %167 : memref<1x128xf32, #tpu.memory_space<vmem>> -> memref<128xf32, #tpu.memory_space<vmem>>
    %169 = tpu.memref_slice %arg8[%c0_i32_95] : memref<2x!tpu.dma_semaphore, #tpu.memory_space<semaphore_mem>> -> memref<1x!tpu.dma_semaphore, #tpu.memory_space<semaphore_mem>>
    %170 = tpu.memref_squeeze %169 : memref<1x!tpu.dma_semaphore, #tpu.memory_space<semaphore_mem>> -> memref<!tpu.dma_semaphore, #tpu.memory_space<semaphore_mem>>
    tpu.enqueue_dma source(%166 : memref<128xf32, #tpu.memory_space<any>>) target(%168 : memref<128xf32, #tpu.memory_space<vmem>>) target_semaphore(%170 : memref<!tpu.dma_semaphore, #tpu.memory_space<semaphore_mem>>)
    %c7_i32_98 = arith.constant 7 : i32
    %c1_i32_99 = arith.constant 1 : i32
    %c0_i32_100 = arith.constant 0 : i32
    %171 = tpu.memref_slice %arg4[%164, %c0_i32_100] : memref<64x128xf32, #tpu.memory_space<any>> -> memref<1x128xf32, #tpu.memory_space<any>>
    %172 = tpu.memref_squeeze %171 : memref<1x128xf32, #tpu.memory_space<any>> -> memref<128xf32, #tpu.memory_space<any>>
    %c0_i32_101 = arith.constant 0 : i32
    %173 = tpu.memref_slice %arg7[%c7_i32_98, %c0_i32_101] : memref<8x128xf32, #tpu.memory_space<vmem>> -> memref<1x128xf32, #tpu.memory_space<vmem>>
    %174 = tpu.memref_squeeze %173 : memref<1x128xf32, #tpu.memory_space<vmem>> -> memref<128xf32, #tpu.memory_space<vmem>>
    %175 = tpu.memref_slice %arg8[%c1_i32_99] : memref<2x!tpu.dma_semaphore, #tpu.memory_space<semaphore_mem>> -> memref<1x!tpu.dma_semaphore, #tpu.memory_space<semaphore_mem>>
    %176 = tpu.memref_squeeze %175 : memref<1x!tpu.dma_semaphore, #tpu.memory_space<semaphore_mem>> -> memref<!tpu.dma_semaphore, #tpu.memory_space<semaphore_mem>>
    tpu.enqueue_dma source(%172 : memref<128xf32, #tpu.memory_space<any>>) target(%174 : memref<128xf32, #tpu.memory_space<vmem>>) target_semaphore(%176 : memref<!tpu.dma_semaphore, #tpu.memory_space<semaphore_mem>>)
    %c0_i32_102 = arith.constant 0 : i32
    %c0_i32_103 = arith.constant 0 : i32
    %c0_i32_104 = arith.constant 0 : i32
    %177 = tpu.memref_slice %arg3[%5, %c0_i32_104] : memref<256x128xf32, #tpu.memory_space<any>> -> memref<1x128xf32, #tpu.memory_space<any>>
    %178 = tpu.memref_squeeze %177 : memref<1x128xf32, #tpu.memory_space<any>> -> memref<128xf32, #tpu.memory_space<any>>
    %c0_i32_105 = arith.constant 0 : i32
    %179 = tpu.memref_slice %arg6[%c0_i32_102, %c0_i32_105] : memref<8x128xf32, #tpu.memory_space<vmem>> -> memref<1x128xf32, #tpu.memory_space<vmem>>
    %180 = tpu.memref_squeeze %179 : memref<1x128xf32, #tpu.memory_space<vmem>> -> memref<128xf32, #tpu.memory_space<vmem>>
    %181 = tpu.memref_slice %arg8[%c0_i32_103] : memref<2x!tpu.dma_semaphore, #tpu.memory_space<semaphore_mem>> -> memref<1x!tpu.dma_semaphore, #tpu.memory_space<semaphore_mem>>
    %182 = tpu.memref_squeeze %181 : memref<1x!tpu.dma_semaphore, #tpu.memory_space<semaphore_mem>> -> memref<!tpu.dma_semaphore, #tpu.memory_space<semaphore_mem>>
    tpu.wait_dma2 semaphore(%182 : memref<!tpu.dma_semaphore, #tpu.memory_space<semaphore_mem>>) src(%178 : memref<128xf32, #tpu.memory_space<any>>) dst(%180 : memref<128xf32, #tpu.memory_space<vmem>>)
    %c0_i32_106 = arith.constant 0 : i32
    %c1_i32_107 = arith.constant 1 : i32
    %c0_i32_108 = arith.constant 0 : i32
    %183 = tpu.memref_slice %arg4[%10, %c0_i32_108] : memref<64x128xf32, #tpu.memory_space<any>> -> memref<1x128xf32, #tpu.memory_space<any>>
    %184 = tpu.memref_squeeze %183 : memref<1x128xf32, #tpu.memory_space<any>> -> memref<128xf32, #tpu.memory_space<any>>
    %c0_i32_109 = arith.constant 0 : i32
    %185 = tpu.memref_slice %arg7[%c0_i32_106, %c0_i32_109] : memref<8x128xf32, #tpu.memory_space<vmem>> -> memref<1x128xf32, #tpu.memory_space<vmem>>
    %186 = tpu.memref_squeeze %185 : memref<1x128xf32, #tpu.memory_space<vmem>> -> memref<128xf32, #tpu.memory_space<vmem>>
    %187 = tpu.memref_slice %arg8[%c1_i32_107] : memref<2x!tpu.dma_semaphore, #tpu.memory_space<semaphore_mem>> -> memref<1x!tpu.dma_semaphore, #tpu.memory_space<semaphore_mem>>
    %188 = tpu.memref_squeeze %187 : memref<1x!tpu.dma_semaphore, #tpu.memory_space<semaphore_mem>> -> memref<!tpu.dma_semaphore, #tpu.memory_space<semaphore_mem>>
    tpu.wait_dma2 semaphore(%188 : memref<!tpu.dma_semaphore, #tpu.memory_space<semaphore_mem>>) src(%184 : memref<128xf32, #tpu.memory_space<any>>) dst(%186 : memref<128xf32, #tpu.memory_space<vmem>>)
    %c1_i32_110 = arith.constant 1 : i32
    %c0_i32_111 = arith.constant 0 : i32
    %c0_i32_112 = arith.constant 0 : i32
    %189 = tpu.memref_slice %arg3[%27, %c0_i32_112] : memref<256x128xf32, #tpu.memory_space<any>> -> memref<1x128xf32, #tpu.memory_space<any>>
    %190 = tpu.memref_squeeze %189 : memref<1x128xf32, #tpu.memory_space<any>> -> memref<128xf32, #tpu.memory_space<any>>
    %c0_i32_113 = arith.constant 0 : i32
    %191 = tpu.memref_slice %arg6[%c1_i32_110, %c0_i32_113] : memref<8x128xf32, #tpu.memory_space<vmem>> -> memref<1x128xf32, #tpu.memory_space<vmem>>
    %192 = tpu.memref_squeeze %191 : memref<1x128xf32, #tpu.memory_space<vmem>> -> memref<128xf32, #tpu.memory_space<vmem>>
    %193 = tpu.memref_slice %arg8[%c0_i32_111] : memref<2x!tpu.dma_semaphore, #tpu.memory_space<semaphore_mem>> -> memref<1x!tpu.dma_semaphore, #tpu.memory_space<semaphore_mem>>
    %194 = tpu.memref_squeeze %193 : memref<1x!tpu.dma_semaphore, #tpu.memory_space<semaphore_mem>> -> memref<!tpu.dma_semaphore, #tpu.memory_space<semaphore_mem>>
    tpu.wait_dma2 semaphore(%194 : memref<!tpu.dma_semaphore, #tpu.memory_space<semaphore_mem>>) src(%190 : memref<128xf32, #tpu.memory_space<any>>) dst(%192 : memref<128xf32, #tpu.memory_space<vmem>>)
    %c1_i32_114 = arith.constant 1 : i32
    %c1_i32_115 = arith.constant 1 : i32
    %c0_i32_116 = arith.constant 0 : i32
    %195 = tpu.memref_slice %arg4[%32, %c0_i32_116] : memref<64x128xf32, #tpu.memory_space<any>> -> memref<1x128xf32, #tpu.memory_space<any>>
    %196 = tpu.memref_squeeze %195 : memref<1x128xf32, #tpu.memory_space<any>> -> memref<128xf32, #tpu.memory_space<any>>
    %c0_i32_117 = arith.constant 0 : i32
    %197 = tpu.memref_slice %arg7[%c1_i32_114, %c0_i32_117] : memref<8x128xf32, #tpu.memory_space<vmem>> -> memref<1x128xf32, #tpu.memory_space<vmem>>
    %198 = tpu.memref_squeeze %197 : memref<1x128xf32, #tpu.memory_space<vmem>> -> memref<128xf32, #tpu.memory_space<vmem>>
    %199 = tpu.memref_slice %arg8[%c1_i32_115] : memref<2x!tpu.dma_semaphore, #tpu.memory_space<semaphore_mem>> -> memref<1x!tpu.dma_semaphore, #tpu.memory_space<semaphore_mem>>
    %200 = tpu.memref_squeeze %199 : memref<1x!tpu.dma_semaphore, #tpu.memory_space<semaphore_mem>> -> memref<!tpu.dma_semaphore, #tpu.memory_space<semaphore_mem>>
    tpu.wait_dma2 semaphore(%200 : memref<!tpu.dma_semaphore, #tpu.memory_space<semaphore_mem>>) src(%196 : memref<128xf32, #tpu.memory_space<any>>) dst(%198 : memref<128xf32, #tpu.memory_space<vmem>>)
    %c2_i32_118 = arith.constant 2 : i32
    %c0_i32_119 = arith.constant 0 : i32
    %c0_i32_120 = arith.constant 0 : i32
    %201 = tpu.memref_slice %arg3[%49, %c0_i32_120] : memref<256x128xf32, #tpu.memory_space<any>> -> memref<1x128xf32, #tpu.memory_space<any>>
    %202 = tpu.memref_squeeze %201 : memref<1x128xf32, #tpu.memory_space<any>> -> memref<128xf32, #tpu.memory_space<any>>
    %c0_i32_121 = arith.constant 0 : i32
    %203 = tpu.memref_slice %arg6[%c2_i32_118, %c0_i32_121] : memref<8x128xf32, #tpu.memory_space<vmem>> -> memref<1x128xf32, #tpu.memory_space<vmem>>
    %204 = tpu.memref_squeeze %203 : memref<1x128xf32, #tpu.memory_space<vmem>> -> memref<128xf32, #tpu.memory_space<vmem>>
    %205 = tpu.memref_slice %arg8[%c0_i32_119] : memref<2x!tpu.dma_semaphore, #tpu.memory_space<semaphore_mem>> -> memref<1x!tpu.dma_semaphore, #tpu.memory_space<semaphore_mem>>
    %206 = tpu.memref_squeeze %205 : memref<1x!tpu.dma_semaphore, #tpu.memory_space<semaphore_mem>> -> memref<!tpu.dma_semaphore, #tpu.memory_space<semaphore_mem>>
    tpu.wait_dma2 semaphore(%206 : memref<!tpu.dma_semaphore, #tpu.memory_space<semaphore_mem>>) src(%202 : memref<128xf32, #tpu.memory_space<any>>) dst(%204 : memref<128xf32, #tpu.memory_space<vmem>>)
    %c2_i32_122 = arith.constant 2 : i32
    %c1_i32_123 = arith.constant 1 : i32
    %c0_i32_124 = arith.constant 0 : i32
    %207 = tpu.memref_slice %arg4[%54, %c0_i32_124] : memref<64x128xf32, #tpu.memory_space<any>> -> memref<1x128xf32, #tpu.memory_space<any>>
    %208 = tpu.memref_squeeze %207 : memref<1x128xf32, #tpu.memory_space<any>> -> memref<128xf32, #tpu.memory_space<any>>
    %c0_i32_125 = arith.constant 0 : i32
    %209 = tpu.memref_slice %arg7[%c2_i32_122, %c0_i32_125] : memref<8x128xf32, #tpu.memory_space<vmem>> -> memref<1x128xf32, #tpu.memory_space<vmem>>
    %210 = tpu.memref_squeeze %209 : memref<1x128xf32, #tpu.memory_space<vmem>> -> memref<128xf32, #tpu.memory_space<vmem>>
    %211 = tpu.memref_slice %arg8[%c1_i32_123] : memref<2x!tpu.dma_semaphore, #tpu.memory_space<semaphore_mem>> -> memref<1x!tpu.dma_semaphore, #tpu.memory_space<semaphore_mem>>
    %212 = tpu.memref_squeeze %211 : memref<1x!tpu.dma_semaphore, #tpu.memory_space<semaphore_mem>> -> memref<!tpu.dma_semaphore, #tpu.memory_space<semaphore_mem>>
    tpu.wait_dma2 semaphore(%212 : memref<!tpu.dma_semaphore, #tpu.memory_space<semaphore_mem>>) src(%208 : memref<128xf32, #tpu.memory_space<any>>) dst(%210 : memref<128xf32, #tpu.memory_space<vmem>>)
    %c3_i32_126 = arith.constant 3 : i32
    %c0_i32_127 = arith.constant 0 : i32
    %c0_i32_128 = arith.constant 0 : i32
    %213 = tpu.memref_slice %arg3[%71, %c0_i32_128] : memref<256x128xf32, #tpu.memory_space<any>> -> memref<1x128xf32, #tpu.memory_space<any>>
    %214 = tpu.memref_squeeze %213 : memref<1x128xf32, #tpu.memory_space<any>> -> memref<128xf32, #tpu.memory_space<any>>
    %c0_i32_129 = arith.constant 0 : i32
    %215 = tpu.memref_slice %arg6[%c3_i32_126, %c0_i32_129] : memref<8x128xf32, #tpu.memory_space<vmem>> -> memref<1x128xf32, #tpu.memory_space<vmem>>
    %216 = tpu.memref_squeeze %215 : memref<1x128xf32, #tpu.memory_space<vmem>> -> memref<128xf32, #tpu.memory_space<vmem>>
    %217 = tpu.memref_slice %arg8[%c0_i32_127] : memref<2x!tpu.dma_semaphore, #tpu.memory_space<semaphore_mem>> -> memref<1x!tpu.dma_semaphore, #tpu.memory_space<semaphore_mem>>
    %218 = tpu.memref_squeeze %217 : memref<1x!tpu.dma_semaphore, #tpu.memory_space<semaphore_mem>> -> memref<!tpu.dma_semaphore, #tpu.memory_space<semaphore_mem>>
    tpu.wait_dma2 semaphore(%218 : memref<!tpu.dma_semaphore, #tpu.memory_space<semaphore_mem>>) src(%214 : memref<128xf32, #tpu.memory_space<any>>) dst(%216 : memref<128xf32, #tpu.memory_space<vmem>>)
    %c3_i32_130 = arith.constant 3 : i32
    %c1_i32_131 = arith.constant 1 : i32
    %c0_i32_132 = arith.constant 0 : i32
    %219 = tpu.memref_slice %arg4[%76, %c0_i32_132] : memref<64x128xf32, #tpu.memory_space<any>> -> memref<1x128xf32, #tpu.memory_space<any>>
    %220 = tpu.memref_squeeze %219 : memref<1x128xf32, #tpu.memory_space<any>> -> memref<128xf32, #tpu.memory_space<any>>
    %c0_i32_133 = arith.constant 0 : i32
    %221 = tpu.memref_slice %arg7[%c3_i32_130, %c0_i32_133] : memref<8x128xf32, #tpu.memory_space<vmem>> -> memref<1x128xf32, #tpu.memory_space<vmem>>
    %222 = tpu.memref_squeeze %221 : memref<1x128xf32, #tpu.memory_space<vmem>> -> memref<128xf32, #tpu.memory_space<vmem>>
    %223 = tpu.memref_slice %arg8[%c1_i32_131] : memref<2x!tpu.dma_semaphore, #tpu.memory_space<semaphore_mem>> -> memref<1x!tpu.dma_semaphore, #tpu.memory_space<semaphore_mem>>
    %224 = tpu.memref_squeeze %223 : memref<1x!tpu.dma_semaphore, #tpu.memory_space<semaphore_mem>> -> memref<!tpu.dma_semaphore, #tpu.memory_space<semaphore_mem>>
    tpu.wait_dma2 semaphore(%224 : memref<!tpu.dma_semaphore, #tpu.memory_space<semaphore_mem>>) src(%220 : memref<128xf32, #tpu.memory_space<any>>) dst(%222 : memref<128xf32, #tpu.memory_space<vmem>>)
    %c4_i32_134 = arith.constant 4 : i32
    %c0_i32_135 = arith.constant 0 : i32
    %c0_i32_136 = arith.constant 0 : i32
    %225 = tpu.memref_slice %arg3[%93, %c0_i32_136] : memref<256x128xf32, #tpu.memory_space<any>> -> memref<1x128xf32, #tpu.memory_space<any>>
    %226 = tpu.memref_squeeze %225 : memref<1x128xf32, #tpu.memory_space<any>> -> memref<128xf32, #tpu.memory_space<any>>
    %c0_i32_137 = arith.constant 0 : i32
    %227 = tpu.memref_slice %arg6[%c4_i32_134, %c0_i32_137] : memref<8x128xf32, #tpu.memory_space<vmem>> -> memref<1x128xf32, #tpu.memory_space<vmem>>
    %228 = tpu.memref_squeeze %227 : memref<1x128xf32, #tpu.memory_space<vmem>> -> memref<128xf32, #tpu.memory_space<vmem>>
    %229 = tpu.memref_slice %arg8[%c0_i32_135] : memref<2x!tpu.dma_semaphore, #tpu.memory_space<semaphore_mem>> -> memref<1x!tpu.dma_semaphore, #tpu.memory_space<semaphore_mem>>
    %230 = tpu.memref_squeeze %229 : memref<1x!tpu.dma_semaphore, #tpu.memory_space<semaphore_mem>> -> memref<!tpu.dma_semaphore, #tpu.memory_space<semaphore_mem>>
    tpu.wait_dma2 semaphore(%230 : memref<!tpu.dma_semaphore, #tpu.memory_space<semaphore_mem>>) src(%226 : memref<128xf32, #tpu.memory_space<any>>) dst(%228 : memref<128xf32, #tpu.memory_space<vmem>>)
    %c4_i32_138 = arith.constant 4 : i32
    %c1_i32_139 = arith.constant 1 : i32
    %c0_i32_140 = arith.constant 0 : i32
    %231 = tpu.memref_slice %arg4[%98, %c0_i32_140] : memref<64x128xf32, #tpu.memory_space<any>> -> memref<1x128xf32, #tpu.memory_space<any>>
    %232 = tpu.memref_squeeze %231 : memref<1x128xf32, #tpu.memory_space<any>> -> memref<128xf32, #tpu.memory_space<any>>
    %c0_i32_141 = arith.constant 0 : i32
    %233 = tpu.memref_slice %arg7[%c4_i32_138, %c0_i32_141] : memref<8x128xf32, #tpu.memory_space<vmem>> -> memref<1x128xf32, #tpu.memory_space<vmem>>
    %234 = tpu.memref_squeeze %233 : memref<1x128xf32, #tpu.memory_space<vmem>> -> memref<128xf32, #tpu.memory_space<vmem>>
    %235 = tpu.memref_slice %arg8[%c1_i32_139] : memref<2x!tpu.dma_semaphore, #tpu.memory_space<semaphore_mem>> -> memref<1x!tpu.dma_semaphore, #tpu.memory_space<semaphore_mem>>
    %236 = tpu.memref_squeeze %235 : memref<1x!tpu.dma_semaphore, #tpu.memory_space<semaphore_mem>> -> memref<!tpu.dma_semaphore, #tpu.memory_space<semaphore_mem>>
    tpu.wait_dma2 semaphore(%236 : memref<!tpu.dma_semaphore, #tpu.memory_space<semaphore_mem>>) src(%232 : memref<128xf32, #tpu.memory_space<any>>) dst(%234 : memref<128xf32, #tpu.memory_space<vmem>>)
    %c5_i32_142 = arith.constant 5 : i32
    %c0_i32_143 = arith.constant 0 : i32
    %c0_i32_144 = arith.constant 0 : i32
    %237 = tpu.memref_slice %arg3[%115, %c0_i32_144] : memref<256x128xf32, #tpu.memory_space<any>> -> memref<1x128xf32, #tpu.memory_space<any>>
    %238 = tpu.memref_squeeze %237 : memref<1x128xf32, #tpu.memory_space<any>> -> memref<128xf32, #tpu.memory_space<any>>
    %c0_i32_145 = arith.constant 0 : i32
    %239 = tpu.memref_slice %arg6[%c5_i32_142, %c0_i32_145] : memref<8x128xf32, #tpu.memory_space<vmem>> -> memref<1x128xf32, #tpu.memory_space<vmem>>
    %240 = tpu.memref_squeeze %239 : memref<1x128xf32, #tpu.memory_space<vmem>> -> memref<128xf32, #tpu.memory_space<vmem>>
    %241 = tpu.memref_slice %arg8[%c0_i32_143] : memref<2x!tpu.dma_semaphore, #tpu.memory_space<semaphore_mem>> -> memref<1x!tpu.dma_semaphore, #tpu.memory_space<semaphore_mem>>
    %242 = tpu.memref_squeeze %241 : memref<1x!tpu.dma_semaphore, #tpu.memory_space<semaphore_mem>> -> memref<!tpu.dma_semaphore, #tpu.memory_space<semaphore_mem>>
    tpu.wait_dma2 semaphore(%242 : memref<!tpu.dma_semaphore, #tpu.memory_space<semaphore_mem>>) src(%238 : memref<128xf32, #tpu.memory_space<any>>) dst(%240 : memref<128xf32, #tpu.memory_space<vmem>>)
    %c5_i32_146 = arith.constant 5 : i32
    %c1_i32_147 = arith.constant 1 : i32
    %c0_i32_148 = arith.constant 0 : i32
    %243 = tpu.memref_slice %arg4[%120, %c0_i32_148] : memref<64x128xf32, #tpu.memory_space<any>> -> memref<1x128xf32, #tpu.memory_space<any>>
    %244 = tpu.memref_squeeze %243 : memref<1x128xf32, #tpu.memory_space<any>> -> memref<128xf32, #tpu.memory_space<any>>
    %c0_i32_149 = arith.constant 0 : i32
    %245 = tpu.memref_slice %arg7[%c5_i32_146, %c0_i32_149] : memref<8x128xf32, #tpu.memory_space<vmem>> -> memref<1x128xf32, #tpu.memory_space<vmem>>
    %246 = tpu.memref_squeeze %245 : memref<1x128xf32, #tpu.memory_space<vmem>> -> memref<128xf32, #tpu.memory_space<vmem>>
    %247 = tpu.memref_slice %arg8[%c1_i32_147] : memref<2x!tpu.dma_semaphore, #tpu.memory_space<semaphore_mem>> -> memref<1x!tpu.dma_semaphore, #tpu.memory_space<semaphore_mem>>
    %248 = tpu.memref_squeeze %247 : memref<1x!tpu.dma_semaphore, #tpu.memory_space<semaphore_mem>> -> memref<!tpu.dma_semaphore, #tpu.memory_space<semaphore_mem>>
    tpu.wait_dma2 semaphore(%248 : memref<!tpu.dma_semaphore, #tpu.memory_space<semaphore_mem>>) src(%244 : memref<128xf32, #tpu.memory_space<any>>) dst(%246 : memref<128xf32, #tpu.memory_space<vmem>>)
    %c6_i32_150 = arith.constant 6 : i32
    %c0_i32_151 = arith.constant 0 : i32
    %c0_i32_152 = arith.constant 0 : i32
    %249 = tpu.memref_slice %arg3[%137, %c0_i32_152] : memref<256x128xf32, #tpu.memory_space<any>> -> memref<1x128xf32, #tpu.memory_space<any>>
    %250 = tpu.memref_squeeze %249 : memref<1x128xf32, #tpu.memory_space<any>> -> memref<128xf32, #tpu.memory_space<any>>
    %c0_i32_153 = arith.constant 0 : i32
    %251 = tpu.memref_slice %arg6[%c6_i32_150, %c0_i32_153] : memref<8x128xf32, #tpu.memory_space<vmem>> -> memref<1x128xf32, #tpu.memory_space<vmem>>
    %252 = tpu.memref_squeeze %251 : memref<1x128xf32, #tpu.memory_space<vmem>> -> memref<128xf32, #tpu.memory_space<vmem>>
    %253 = tpu.memref_slice %arg8[%c0_i32_151] : memref<2x!tpu.dma_semaphore, #tpu.memory_space<semaphore_mem>> -> memref<1x!tpu.dma_semaphore, #tpu.memory_space<semaphore_mem>>
    %254 = tpu.memref_squeeze %253 : memref<1x!tpu.dma_semaphore, #tpu.memory_space<semaphore_mem>> -> memref<!tpu.dma_semaphore, #tpu.memory_space<semaphore_mem>>
    tpu.wait_dma2 semaphore(%254 : memref<!tpu.dma_semaphore, #tpu.memory_space<semaphore_mem>>) src(%250 : memref<128xf32, #tpu.memory_space<any>>) dst(%252 : memref<128xf32, #tpu.memory_space<vmem>>)
    %c6_i32_154 = arith.constant 6 : i32
    %c1_i32_155 = arith.constant 1 : i32
    %c0_i32_156 = arith.constant 0 : i32
    %255 = tpu.memref_slice %arg4[%142, %c0_i32_156] : memref<64x128xf32, #tpu.memory_space<any>> -> memref<1x128xf32, #tpu.memory_space<any>>
    %256 = tpu.memref_squeeze %255 : memref<1x128xf32, #tpu.memory_space<any>> -> memref<128xf32, #tpu.memory_space<any>>
    %c0_i32_157 = arith.constant 0 : i32
    %257 = tpu.memref_slice %arg7[%c6_i32_154, %c0_i32_157] : memref<8x128xf32, #tpu.memory_space<vmem>> -> memref<1x128xf32, #tpu.memory_space<vmem>>
    %258 = tpu.memref_squeeze %257 : memref<1x128xf32, #tpu.memory_space<vmem>> -> memref<128xf32, #tpu.memory_space<vmem>>
    %259 = tpu.memref_slice %arg8[%c1_i32_155] : memref<2x!tpu.dma_semaphore, #tpu.memory_space<semaphore_mem>> -> memref<1x!tpu.dma_semaphore, #tpu.memory_space<semaphore_mem>>
    %260 = tpu.memref_squeeze %259 : memref<1x!tpu.dma_semaphore, #tpu.memory_space<semaphore_mem>> -> memref<!tpu.dma_semaphore, #tpu.memory_space<semaphore_mem>>
    tpu.wait_dma2 semaphore(%260 : memref<!tpu.dma_semaphore, #tpu.memory_space<semaphore_mem>>) src(%256 : memref<128xf32, #tpu.memory_space<any>>) dst(%258 : memref<128xf32, #tpu.memory_space<vmem>>)
    %c7_i32_158 = arith.constant 7 : i32
    %c0_i32_159 = arith.constant 0 : i32
    %c0_i32_160 = arith.constant 0 : i32
    %261 = tpu.memref_slice %arg3[%159, %c0_i32_160] : memref<256x128xf32, #tpu.memory_space<any>> -> memref<1x128xf32, #tpu.memory_space<any>>
    %262 = tpu.memref_squeeze %261 : memref<1x128xf32, #tpu.memory_space<any>> -> memref<128xf32, #tpu.memory_space<any>>
    %c0_i32_161 = arith.constant 0 : i32
    %263 = tpu.memref_slice %arg6[%c7_i32_158, %c0_i32_161] : memref<8x128xf32, #tpu.memory_space<vmem>> -> memref<1x128xf32, #tpu.memory_space<vmem>>
    %264 = tpu.memref_squeeze %263 : memref<1x128xf32, #tpu.memory_space<vmem>> -> memref<128xf32, #tpu.memory_space<vmem>>
    %265 = tpu.memref_slice %arg8[%c0_i32_159] : memref<2x!tpu.dma_semaphore, #tpu.memory_space<semaphore_mem>> -> memref<1x!tpu.dma_semaphore, #tpu.memory_space<semaphore_mem>>
    %266 = tpu.memref_squeeze %265 : memref<1x!tpu.dma_semaphore, #tpu.memory_space<semaphore_mem>> -> memref<!tpu.dma_semaphore, #tpu.memory_space<semaphore_mem>>
    tpu.wait_dma2 semaphore(%266 : memref<!tpu.dma_semaphore, #tpu.memory_space<semaphore_mem>>) src(%262 : memref<128xf32, #tpu.memory_space<any>>) dst(%264 : memref<128xf32, #tpu.memory_space<vmem>>)
    %c7_i32_162 = arith.constant 7 : i32
    %c1_i32_163 = arith.constant 1 : i32
    %c0_i32_164 = arith.constant 0 : i32
    %267 = tpu.memref_slice %arg4[%164, %c0_i32_164] : memref<64x128xf32, #tpu.memory_space<any>> -> memref<1x128xf32, #tpu.memory_space<any>>
    %268 = tpu.memref_squeeze %267 : memref<1x128xf32, #tpu.memory_space<any>> -> memref<128xf32, #tpu.memory_space<any>>
    %c0_i32_165 = arith.constant 0 : i32
    %269 = tpu.memref_slice %arg7[%c7_i32_162, %c0_i32_165] : memref<8x128xf32, #tpu.memory_space<vmem>> -> memref<1x128xf32, #tpu.memory_space<vmem>>
    %270 = tpu.memref_squeeze %269 : memref<1x128xf32, #tpu.memory_space<vmem>> -> memref<128xf32, #tpu.memory_space<vmem>>
    %271 = tpu.memref_slice %arg8[%c1_i32_163] : memref<2x!tpu.dma_semaphore, #tpu.memory_space<semaphore_mem>> -> memref<1x!tpu.dma_semaphore, #tpu.memory_space<semaphore_mem>>
    %272 = tpu.memref_squeeze %271 : memref<1x!tpu.dma_semaphore, #tpu.memory_space<semaphore_mem>> -> memref<!tpu.dma_semaphore, #tpu.memory_space<semaphore_mem>>
    tpu.wait_dma2 semaphore(%272 : memref<!tpu.dma_semaphore, #tpu.memory_space<semaphore_mem>>) src(%268 : memref<128xf32, #tpu.memory_space<any>>) dst(%270 : memref<128xf32, #tpu.memory_space<vmem>>)
    %c0 = arith.constant 0 : index
    %c0_166 = arith.constant 0 : index
    %273 = vector.load %arg6[%c0, %c0_166] : memref<8x128xf32, #tpu.memory_space<vmem>>, vector<8x128xf32>
    %c0_167 = arith.constant 0 : index
    %c0_168 = arith.constant 0 : index
    %274 = vector.load %arg7[%c0_167, %c0_168] : memref<8x128xf32, #tpu.memory_space<vmem>>, vector<8x128xf32>
    %275 = arith.addf %273, %274 : vector<8x128xf32>
    %c0_169 = arith.constant 0 : index
    %c0_170 = arith.constant 0 : index
    %276 = vector.load %arg5[%c0_169, %c0_170] : memref<8x128xf32, #tpu.memory_space<vmem>>, vector<8x128xf32>
    tpu.vector_store %arg5[%c0_169, %c0_170], %275 {strides = array<i32>} : memref<8x128xf32, #tpu.memory_space<vmem>>, vector<8x128xf32>,
    return
  }
  func.func @transform_2(%arg0: i32, %arg1: memref<16xi32, #tpu.memory_space<smem>>, %arg2: memref<16xi32, #tpu.memory_space<smem>>) -> (i32, i32) {
    %c0_i32 = arith.constant 0 : i32
    %c0_i32_0 = arith.constant 0 : i32
    return %arg0, %c0_i32 : i32, i32
  }
}

</mosaic_0001>

<llo_original>
// kernel: tpu_custom_call.1
$region0: #{tpu_custom_call.1}
  #allocation0 [shape = 'u32[]', space=smem, size = 0x4, offset = 0x4, fixed_abs, tag = 'smem constant byte address 0x4 - core index']
  #allocation1 [shape = 'u32[144,128]{1,0:T(1,128)}', space=vmem, size = 0x12000, scoped, tag = 'internal scratch']
  #allocation2 [shape = 'f32[8,128]{1,0:T(8,128)}', space=vmem, size = 0x1000, scoped, tag = 'scratch operand']
  #allocation3 [shape = 'f32[8,128]{1,0:T(8,128)}', space=vmem, size = 0x1000, scoped, tag = 'scratch operand']
  #allocation4 [shape = 's32[2]{0}', space=sflag, size = 0x8, scoped, tag = 'scratch operand']
  #allocation5 [shape = 's32[1]{0}', space=sflag, size = 0x4, scoped, tag = 'scoped memory for tpu_custom_call.1']
  #allocation6 [shape = 'u8[512]{0}', space=smem, size = 0x200, scoped, tag = 'prefetched SMEM operand 0']
  #allocation7 [shape = 'u8[512]{0}', space=smem, size = 0x200, scoped, tag = 'prefetched SMEM operand 1']
  #allocation10 [shape = 's32[]', space=sflag, size = 0x4, offset = 0, fixed_abs, tag = 'sflag constant byte address 0x0 - dummy sync flag']
  #allocation11 [shape = 's32[]', space=sflag, size = 0x4, offset = 0, fixed_abs, tag = 'sflag constant byte address 0x0 - dummy sync flag']
  #allocation12 [shape = 'u32[]', space=smem, size = 0x4, offset = 0x44, fixed_abs, tag = 'smem constant byte address 0x44 - assertion arg 0']
  #allocation13 [shape = 'u32[]', space=smem, size = 0x4, offset = 0x48, fixed_abs, tag = 'smem constant byte address 0x48 - assertion arg 1']
  #allocation14 [shape = 's32[]', space=sflag, size = 0x4, offset = 0, fixed_abs, tag = 'sflag constant byte address 0x0 - dummy sync flag']
  #allocation15 [shape = 's32[]', space=sflag, size = 0x4, offset = 0, fixed_abs, tag = 'sflag constant byte address 0x0 - dummy sync flag']
  #allocation16 [shape = 's32[]', space=sflag, size = 0x4, offset = 0, fixed_abs, tag = 'sflag constant byte address 0x0 - dummy sync flag']
  #allocation17 [shape = 's32[]', space=sflag, size = 0x4, offset = 0, fixed_abs, tag = 'sflag constant byte address 0x0 - dummy sync flag']
  #allocation18 [shape = 's32[]', space=sflag, size = 0x4, offset = 0, fixed_abs, tag = 'sflag constant byte address 0x0 - dummy sync flag']
  #allocation19 [shape = 's32[]', space=sflag, size = 0x4, offset = 0, fixed_abs, tag = 'sflag constant byte address 0x0 - dummy sync flag']
  #allocation20 [shape = 's32[]', space=sflag, size = 0x4, offset = 0, fixed_abs, tag = 'sflag constant byte address 0x0 - dummy sync flag']
  #allocation21 [shape = 's32[]', space=sflag, size = 0x4, offset = 0, fixed_abs, tag = 'sflag constant byte address 0x0 - dummy sync flag']
  #allocation22 [shape = 's32[]', space=sflag, size = 0x4, offset = 0, fixed_abs, tag = 'sflag constant byte address 0x0 - dummy sync flag']
  #allocation23 [shape = 's32[]', space=sflag, size = 0x4, offset = 0, fixed_abs, tag = 'sflag constant byte address 0x0 - dummy sync flag']
  #allocation24 [shape = 's32[]', space=sflag, size = 0x4, offset = 0, fixed_abs, tag = 'sflag constant byte address 0x0 - dummy sync flag']
  #allocation25 [shape = 's32[]', space=sflag, size = 0x4, offset = 0, fixed_abs, tag = 'sflag constant byte address 0x0 - dummy sync flag']
  #allocation26 [shape = 's32[]', space=sflag, size = 0x4, offset = 0, fixed_abs, tag = 'sflag constant byte address 0x0 - dummy sync flag']
  #allocation27 [shape = 's32[]', space=sflag, size = 0x4, offset = 0, fixed_abs, tag = 'sflag constant byte address 0x0 - dummy sync flag']
  #allocation28 [shape = 's32[]', space=sflag, size = 0x4, offset = 0, fixed_abs, tag = 'sflag constant byte address 0x0 - dummy sync flag']
  #allocation29 [shape = 's32[]', space=sflag, size = 0x4, offset = 0, fixed_abs, tag = 'sflag constant byte address 0x0 - dummy sync flag']
  #allocation30 [shape = 's32[]', space=sflag, size = 0x4, offset = 0, fixed_abs, tag = 'sflag constant byte address 0x0 - dummy sync flag']
  #allocation31 [shape = 's32[]', space=sflag, size = 0x4, offset = 0, fixed_abs, tag = 'sflag constant byte address 0x0 - dummy sync flag']
  #allocation32 [shape = 's32[]', space=sflag, size = 0x4, offset = 0, fixed_abs, tag = 'sflag constant byte address 0x0 - dummy sync flag']
  #allocation33 [shape = 's32[]', space=sflag, size = 0x4, offset = 0, fixed_abs, tag = 'sflag constant byte address 0x0 - dummy sync flag']
  #allocation34 [shape = 's32[]', space=sflag, size = 0x4, offset = 0, fixed_abs, tag = 'sflag constant byte address 0x0 - dummy sync flag']
  #allocation35 [shape = 's32[]', space=sflag, size = 0x4, offset = 0, fixed_abs, tag = 'sflag constant byte address 0x0 - dummy sync flag']
  #allocation36 [shape = 's32[]', space=sflag, size = 0x4, offset = 0, fixed_abs, tag = 'sflag constant byte address 0x0 - dummy sync flag']
  #allocation37 [shape = 's32[]', space=sflag, size = 0x4, offset = 0, fixed_abs, tag = 'sflag constant byte address 0x0 - dummy sync flag']
  #allocation38 [shape = 's32[]', space=sflag, size = 0x4, offset = 0, fixed_abs, tag = 'sflag constant byte address 0x0 - dummy sync flag']
  #allocation39 [shape = 's32[]', space=sflag, size = 0x4, offset = 0, fixed_abs, tag = 'sflag constant byte address 0x0 - dummy sync flag']
  #allocation40 [shape = 's32[]', space=sflag, size = 0x4, offset = 0, fixed_abs, tag = 'sflag constant byte address 0x0 - dummy sync flag']
  #allocation41 [shape = 's32[]', space=sflag, size = 0x4, offset = 0, fixed_abs, tag = 'sflag constant byte address 0x0 - dummy sync flag']
  #allocation42 [shape = 's32[]', space=sflag, size = 0x4, offset = 0, fixed_abs, tag = 'sflag constant byte address 0x0 - dummy sync flag']
  #allocation43 [shape = 's32[]', space=sflag, size = 0x4, offset = 0, fixed_abs, tag = 'sflag constant byte address 0x0 - dummy sync flag']
  %s0 = inlined_call_operand.hbm [shape: s32[16], index: 0, kind: input, shape index: {}]
  %s1 = inlined_call_operand.vmem [shape: s32[16], index: 1, kind: input, shape index: {}]
  %s2 = inlined_call_operand.hbm [shape: f32[256,128], index: 2, kind: input, shape index: {}]
  %s3 = inlined_call_operand.hbm [shape: f32[64,128], index: 3, kind: input, shape index: {}]
  %s4 = inlined_call_operand.hbm [shape: f32[16,128], index: 4, kind: output, shape index: {}]
  %s5 = sld [smem:[#allocation0]]
  $region89: #{tpu_custom_call.1} parent=0
    _
  %s7 = ssub.s32 1, %s5
  %s8 = scalar_select 0, %s7, %s5
  %10 = dma.hbm_to_smem %s0, 16, [#allocation6], [#allocation5]
  %s11 = sshll.u32 %s1, 4
  %s12 = int_to_ptr.vmem [resolvable:$true] %s11
  %14 = dma.vmem_to_smem %s12, 16, [#allocation7], [#allocation5]
  %15 = dma.done [#allocation5], 32
  %16 = sfence
  $region1: #{tpu_custom_call.1} parent=0
    #allocation8 [shape = 'u8[8192]{0}', space=vmem, size = 0x2000, scoped, tag = 'output window, operand 0']
    #allocation9 [shape = 's32[2]{0}', space=sflag, size = 0x8, scoped, tag = 'scoped memory for tpu_custom_call.1']
    %17 = vsyncpa [#allocation9], 0
    %s18 = scalar_lea.sflag [#allocation9], 1
    %19 = vsyncpa %s18, 0
    loop: start=0, step=1, limit=3
    $region2: #{tpu_custom_call.1} parent=1 // loop_pre_header
      _
    $region3: #{tpu_custom_call.1} parent=1 // loop_header
      %s21 = sphi 0, %s25
      %p22 = scmp.ge.s32.totalorder %s21, 3
      %s30 = sphi 0, %s32
      %s33 = sphi 0, %s30
      %s43 = sphi 0, %s33
    $region4: #{tpu_custom_call.1} parent=1 // loop_header_branch
      %24 = sbr.rel (%p22) target = $region8
    $region5: #{tpu_custom_call.1} parent=1 // loop_body
      %s26 = ssub.s32 %s21, 1
      %s27 = sadd.s32 %s21, 1
      %s28 = ssub.s32 %s21, %s27
      %p29 = scmp.eq.s32.totalorder %s28, 0
      %s31 = sadd.s32 %s30, 1
      %s32 = scalar_select %p29, %s30, %s31
      %p34 = pneg %p29
      %p35 = scmp.eq.s32.totalorder %s21, 1
      %p36 = por %p34, %p35
      %p37 = scmp.ne.s32.totalorder %s30, %s33
      %p38 = scmp.eq.s32.totalorder %s21, 0
      %p39 = por %p37, %p38
      %p40 = scmp.ne.s32.totalorder %s30, %s33
      %p41 = scmp.eq.s32.totalorder %s26, 1
      %p42 = por %p40, %p41
      %p44 = scmp.ne.s32.totalorder %s33, %s43
      %p45 = scmp.eq.s32.totalorder %s26, 0
      %p46 = por %p44, %p45
      %p47 = scmp.lt.s32.totalorder %s21, 2
      // Predicated region
      $region9: #{tpu_custom_call.1} parent=5 // pred_check
        %p48 = pneg %p47
      $region10: #{tpu_custom_call.1} parent=5 // pred_check_branch
        %50 = sbr.rel (%p48) target = $region12
      $region11: #{tpu_custom_call.1} parent=5 // pred_region
        %p51 = pneg %p39
        %p52 = pneg %p36
        %s53 = sand.u32 %s30, 1
        %s54 = scalar_lea.sflag [#allocation9], %s53
        %s55 = sand.u32 %s30, 1
        %s56 = smul.addr %s55, 8
        %s57 = scalar_lea.vmem [#allocation8], %s56
        %s58 = smul.u32 %s21, 8
        %s59 = sld [smem:[#allocation6 + %s58]]
        %p60 = scmp.gt.s32.totalorder %s59, 0
        %s61 = scalar_select %p60, %s59, 0
        %p62 = scmp.lt.s32.totalorder %s61, 255
        %s63 = scalar_select %p62, %s61, 255
        %s64 = sld [smem:[#allocation7 + %s58]]
        %p65 = scmp.gt.s32.totalorder %s64, 0
        %s66 = scalar_select %p65, %s64, 0
        %p67 = scmp.lt.s32.totalorder %s66, 63
        %s68 = scalar_select %p67, %s66, 63
        %s69 = smul.addr %s63, 16
        %s70 = scalar_lea.hbm %s2, %s69
        // Predicated region
        $region13: #{tpu_custom_call.1} parent=11 // pred_check
          _
        $region14: #{tpu_custom_call.1} parent=11 // pred_check_branch
          %72 = sbr.rel target = $region16
        $region15: #{tpu_custom_call.1} parent=11 // pred_region
          %73 = sst [smem:[#allocation12]] [#allocation11]
          %74 = sst [smem:[#allocation13]] [#allocation10]
        $region16: #{tpu_custom_call.1} parent=11 // pred_fallthru
          _
        %76 = shalt.err (0)
        %s78 = sshll.u32 [#allocation2], 4
        %s79 = int_to_ptr.vmem [resolvable:$true] %s78
        %81 = dma.hbm_to_vmem [thread:$0]  %s70, 16, %s79, [#allocation4]
        %s82 = smul.addr %s68, 16
        %s83 = scalar_lea.hbm %s3, %s82
        %s84 = scalar_lea.sflag [#allocation4], 1
        // Predicated region
        $region17: #{tpu_custom_call.1} parent=11 // pred_check
          _
        $region18: #{tpu_custom_call.1} parent=11 // pred_check_branch
          %86 = sbr.rel target = $region20
        $region19: #{tpu_custom_call.1} parent=11 // pred_region
          %87 = sst [smem:[#allocation12]] [#allocation15]
          %88 = sst [smem:[#allocation13]] [#allocation14]
        $region20: #{tpu_custom_call.1} parent=11 // pred_fallthru
          _
        %90 = shalt.err (0)
        %s92 = sshll.u32 [#allocation3], 4
        %s93 = int_to_ptr.vmem [resolvable:$true] %s92
        %95 = dma.hbm_to_vmem [thread:$0]  %s83, 16, %s93, %s84
        %s96 = sadd.s32 %s58, 1
        %s97 = sld [smem:[#allocation6 + %s96]]
        %p98 = scmp.gt.s32.totalorder %s97, 0
        %s99 = scalar_select %p98, %s97, 0
        %p100 = scmp.lt.s32.totalorder %s99, 255
        %s101 = scalar_select %p100, %s99, 255
        %s102 = sld [smem:[#allocation7 + %s96]]
        %p103 = scmp.gt.s32.totalorder %s102, 0
        %s104 = scalar_select %p103, %s102, 0
        %p105 = scmp.lt.s32.totalorder %s104, 63
        %s106 = scalar_select %p105, %s104, 63
        %s107 = smul.addr %s101, 16
        %s108 = scalar_lea.hbm %s2, %s107
        %s109 = scalar_lea.vmem [#allocation2], 1
        // Predicated region
        $region21: #{tpu_custom_call.1} parent=11 // pred_check
          _
        $region22: #{tpu_custom_call.1} parent=11 // pred_check_branch
          %111 = sbr.rel target = $region24
        $region23: #{tpu_custom_call.1} parent=11 // pred_region
          %112 = sst [smem:[#allocation12]] [#allocation17]
          %113 = sst [smem:[#allocation13]] [#allocation16]
        $region24: #{tpu_custom_call.1} parent=11 // pred_fallthru
          _
        %115 = shalt.err (0)
        %s117 = sshll.u32 %s109, 4
        %s118 = int_to_ptr.vmem [resolvable:$true] %s117
        %120 = dma.hbm_to_vmem [thread:$0]  %s108, 16, %s118, [#allocation4]
        %s121 = smul.addr %s106, 16
        %s122 = scalar_lea.hbm %s3, %s121
        %s123 = scalar_lea.vmem [#allocation3], 1
        // Predicated region
        $region25: #{tpu_custom_call.1} parent=11 // pred_check
          _
        $region26: #{tpu_custom_call.1} parent=11 // pred_check_branch
          %125 = sbr.rel target = $region28
        $region27: #{tpu_custom_call.1} parent=11 // pred_region
          %126 = sst [smem:[#allocation12]] [#allocation19]
          %127 = sst [smem:[#allocation13]] [#allocation18]
        $region28: #{tpu_custom_call.1} parent=11 // pred_fallthru
          _
        %129 = shalt.err (0)
        %s131 = sshll.u32 %s123, 4
        %s132 = int_to_ptr.vmem [resolvable:$true] %s131
        %134 = dma.hbm_to_vmem [thread:$0]  %s122, 16, %s132, %s84
        %s135 = sadd.s32 %s58, 2
        %s136 = sld [smem:[#allocation6 + %s135]]
        %p137 = scmp.gt.s32.totalorder %s136, 0
        %s138 = scalar_select %p137, %s136, 0
        %p139 = scmp.lt.s32.totalorder %s138, 255
        %s140 = scalar_select %p139, %s138, 255
        %s141 = sld [smem:[#allocation7 + %s135]]
        %p142 = scmp.gt.s32.totalorder %s141, 0
        %s143 = scalar_select %p142, %s141, 0
        %p144 = scmp.lt.s32.totalorder %s143, 63
        %s145 = scalar_select %p144, %s143, 63
        %s146 = smul.addr %s140, 16
        %s147 = scalar_lea.hbm %s2, %s146
        %s148 = scalar_lea.vmem [#allocation2], 2
        // Predicated region
        $region29: #{tpu_custom_call.1} parent=11 // pred_check
          _
        $region30: #{tpu_custom_call.1} parent=11 // pred_check_branch
          %150 = sbr.rel target = $region32
        $region31: #{tpu_custom_call.1} parent=11 // pred_region
          %151 = sst [smem:[#allocation12]] [#allocation21]
          %152 = sst [smem:[#allocation13]] [#allocation20]
        $region32: #{tpu_custom_call.1} parent=11 // pred_fallthru
          _
        %154 = shalt.err (0)
        %s156 = sshll.u32 %s148, 4
        %s157 = int_to_ptr.vmem [resolvable:$true] %s156
        %159 = dma.hbm_to_vmem [thread:$0]  %s147, 16, %s157, [#allocation4]
        %s160 = smul.addr %s145, 16
        %s161 = scalar_lea.hbm %s3, %s160
        %s162 = scalar_lea.vmem [#allocation3], 2
        // Predicated region
        $region33: #{tpu_custom_call.1} parent=11 // pred_check
          _
        $region34: #{tpu_custom_call.1} parent=11 // pred_check_branch
          %164 = sbr.rel target = $region36
        $region35: #{tpu_custom_call.1} parent=11 // pred_region
          %165 = sst [smem:[#allocation12]] [#allocation23]
          %166 = sst [smem:[#allocation13]] [#allocation22]
        $region36: #{tpu_custom_call.1} parent=11 // pred_fallthru
          _
        %168 = shalt.err (0)
        %s170 = sshll.u32 %s162, 4
        %s171 = int_to_ptr.vmem [resolvable:$true] %s170
        %173 = dma.hbm_to_vmem [thread:$0]  %s161, 16, %s171, %s84
        %s174 = sadd.s32 %s58, 3
        %s175 = sld [smem:[#allocation6 + %s174]]
        %p176 = scmp.gt.s32.totalorder %s175, 0
        %s177 = scalar_select %p176, %s175, 0
        %p178 = scmp.lt.s32.totalorder %s177, 255
        %s179 = scalar_select %p178, %s177, 255
        %s180 = sld [smem:[#allocation7 + %s174]]
        %p181 = scmp.gt.s32.totalorder %s180, 0
        %s182 = scalar_select %p181, %s180, 0
        %p183 = scmp.lt.s32.totalorder %s182, 63
        %s184 = scalar_select %p183, %s182, 63
        %s185 = smul.addr %s179, 16
        %s186 = scalar_lea.hbm %s2, %s185
        %s187 = scalar_lea.vmem [#allocation2], 3
        // Predicated region
        $region37: #{tpu_custom_call.1} parent=11 // pred_check
          _
        $region38: #{tpu_custom_call.1} parent=11 // pred_check_branch
          %189 = sbr.rel target = $region40
        $region39: #{tpu_custom_call.1} parent=11 // pred_region
          %190 = sst [smem:[#allocation12]] [#allocation25]
          %191 = sst [smem:[#allocation13]] [#allocation24]
        $region40: #{tpu_custom_call.1} parent=11 // pred_fallthru
          _
        %193 = shalt.err (0)
        %s195 = sshll.u32 %s187, 4
        %s196 = int_to_ptr.vmem [resolvable:$true] %s195
        %198 = dma.hbm_to_vmem [thread:$0]  %s186, 16, %s196, [#allocation4]
        %s199 = smul.addr %s184, 16
        %s200 = scalar_lea.hbm %s3, %s199
        %s201 = scalar_lea.vmem [#allocation3], 3
        // Predicated region
        $region41: #{tpu_custom_call.1} parent=11 // pred_check
          _
        $region42: #{tpu_custom_call.1} parent=11 // pred_check_branch
          %203 = sbr.rel target = $region44
        $region43: #{tpu_custom_call.1} parent=11 // pred_region
          %204 = sst [smem:[#allocation12]] [#allocation27]
          %205 = sst [smem:[#allocation13]] [#allocation26]
        $region44: #{tpu_custom_call.1} parent=11 // pred_fallthru
          _
        %207 = shalt.err (0)
        %s209 = sshll.u32 %s201, 4
        %s210 = int_to_ptr.vmem [resolvable:$true] %s209
        %212 = dma.hbm_to_vmem [thread:$0]  %s200, 16, %s210, %s84
        %s213 = sadd.s32 %s58, 4
        %s214 = sld [smem:[#allocation6 + %s213]]
        %p215 = scmp.gt.s32.totalorder %s214, 0
        %s216 = scalar_select %p215, %s214, 0
        %p217 = scmp.lt.s32.totalorder %s216, 255
        %s218 = scalar_select %p217, %s216, 255
        %s219 = sld [smem:[#allocation7 + %s213]]
        %p220 = scmp.gt.s32.totalorder %s219, 0
        %s221 = scalar_select %p220, %s219, 0
        %p222 = scmp.lt.s32.totalorder %s221, 63
        %s223 = scalar_select %p222, %s221, 63
        %s224 = smul.addr %s218, 16
        %s225 = scalar_lea.hbm %s2, %s224
        %s226 = scalar_lea.vmem [#allocation2], 4
        // Predicated region
        $region45: #{tpu_custom_call.1} parent=11 // pred_check
          _
        $region46: #{tpu_custom_call.1} parent=11 // pred_check_branch
          %228 = sbr.rel target = $region48
        $region47: #{tpu_custom_call.1} parent=11 // pred_region
          %229 = sst [smem:[#allocation12]] [#allocation29]
          %230 = sst [smem:[#allocation13]] [#allocation28]
        $region48: #{tpu_custom_call.1} parent=11 // pred_fallthru
          _
        %232 = shalt.err (0)
        %s234 = sshll.u32 %s226, 4
        %s235 = int_to_ptr.vmem [resolvable:$true] %s234
        %237 = dma.hbm_to_vmem [thread:$0]  %s225, 16, %s235, [#allocation4]
        %s238 = smul.addr %s223, 16
        %s239 = scalar_lea.hbm %s3, %s238
        %s240 = scalar_lea.vmem [#allocation3], 4
        // Predicated region
        $region49: #{tpu_custom_call.1} parent=11 // pred_check
          _
        $region50: #{tpu_custom_call.1} parent=11 // pred_check_branch
          %242 = sbr.rel target = $region52
        $region51: #{tpu_custom_call.1} parent=11 // pred_region
          %243 = sst [smem:[#allocation12]] [#allocation31]
          %244 = sst [smem:[#allocation13]] [#allocation30]
        $region52: #{tpu_custom_call.1} parent=11 // pred_fallthru
          _
        %246 = shalt.err (0)
        %s248 = sshll.u32 %s240, 4
        %s249 = int_to_ptr.vmem [resolvable:$true] %s248
        %251 = dma.hbm_to_vmem [thread:$0]  %s239, 16, %s249, %s84
        %s252 = sadd.s32 %s58, 5
        %s253 = sld [smem:[#allocation6 + %s252]]
        %p254 = scmp.gt.s32.totalorder %s253, 0
        %s255 = scalar_select %p254, %s253, 0
        %p256 = scmp.lt.s32.totalorder %s255, 255
        %s257 = scalar_select %p256, %s255, 255
        %s258 = sld [smem:[#allocation7 + %s252]]
        %p259 = scmp.gt.s32.totalorder %s258, 0
        %s260 = scalar_select %p259, %s258, 0
        %p261 = scmp.lt.s32.totalorder %s260, 63
        %s262 = scalar_select %p261, %s260, 63
        %s263 = smul.addr %s257, 16
        %s264 = scalar_lea.hbm %s2, %s263
        %s265 = scalar_lea.vmem [#allocation2], 5
        // Predicated region
        $region53: #{tpu_custom_call.1} parent=11 // pred_check
          _
        $region54: #{tpu_custom_call.1} parent=11 // pred_check_branch
          %267 = sbr.rel target = $region56
        $region55: #{tpu_custom_call.1} parent=11 // pred_region
          %268 = sst [smem:[#allocation12]] [#allocation33]
          %269 = sst [smem:[#allocation13]] [#allocation32]
        $region56: #{tpu_custom_call.1} parent=11 // pred_fallthru
          _
        %271 = shalt.err (0)
        %s273 = sshll.u32 %s265, 4
        %s274 = int_to_ptr.vmem [resolvable:$true] %s273
        %276 = dma.hbm_to_vmem [thread:$0]  %s264, 16, %s274, [#allocation4]
        %s277 = smul.addr %s262, 16
        %s278 = scalar_lea.hbm %s3, %s277
        %s279 = scalar_lea.vmem [#allocation3], 5
        // Predicated region
        $region57: #{tpu_custom_call.1} parent=11 // pred_check
          _
        $region58: #{tpu_custom_call.1} parent=11 // pred_check_branch
          %281 = sbr.rel target = $region60
        $region59: #{tpu_custom_call.1} parent=11 // pred_region
          %282 = sst [smem:[#allocation12]] [#allocation35]
          %283 = sst [smem:[#allocation13]] [#allocation34]
        $region60: #{tpu_custom_call.1} parent=11 // pred_fallthru
          _
        %285 = shalt.err (0)
        %s287 = sshll.u32 %s279, 4
        %s288 = int_to_ptr.vmem [resolvable:$true] %s287
        %290 = dma.hbm_to_vmem [thread:$0]  %s278, 16, %s288, %s84
        %s291 = sadd.s32 %s58, 6
        %s292 = sld [smem:[#allocation6 + %s291]]
        %p293 = scmp.gt.s32.totalorder %s292, 0
        %s294 = scalar_select %p293, %s292, 0
        %p295 = scmp.lt.s32.totalorder %s294, 255
        %s296 = scalar_select %p295, %s294, 255
        %s297 = sld [smem:[#allocation7 + %s291]]
        %p298 = scmp.gt.s32.totalorder %s297, 0
        %s299 = scalar_select %p298, %s297, 0
        %p300 = scmp.lt.s32.totalorder %s299, 63
        %s301 = scalar_select %p300, %s299, 63
        %s302 = smul.addr %s296, 16
        %s303 = scalar_lea.hbm %s2, %s302
        %s304 = scalar_lea.vmem [#allocation2], 6
        // Predicated region
        $region61: #{tpu_custom_call.1} parent=11 // pred_check
          _
        $region62: #{tpu_custom_call.1} parent=11 // pred_check_branch
          %306 = sbr.rel target = $region64
        $region63: #{tpu_custom_call.1} parent=11 // pred_region
          %307 = sst [smem:[#allocation12]] [#allocation37]
          %308 = sst [smem:[#allocation13]] [#allocation36]
        $region64: #{tpu_custom_call.1} parent=11 // pred_fallthru
          _
        %310 = shalt.err (0)
        %s312 = sshll.u32 %s304, 4
        %s313 = int_to_ptr.vmem [resolvable:$true] %s312
        %315 = dma.hbm_to_vmem [thread:$0]  %s303, 16, %s313, [#allocation4]
        %s316 = smul.addr %s301, 16
        %s317 = scalar_lea.hbm %s3, %s316
        %s318 = scalar_lea.vmem [#allocation3], 6
        // Predicated region
        $region65: #{tpu_custom_call.1} parent=11 // pred_check
          _
        $region66: #{tpu_custom_call.1} parent=11 // pred_check_branch
          %320 = sbr.rel target = $region68
        $region67: #{tpu_custom_call.1} parent=11 // pred_region
          %321 = sst [smem:[#allocation12]] [#allocation39]
          %322 = sst [smem:[#allocation13]] [#allocation38]
        $region68: #{tpu_custom_call.1} parent=11 // pred_fallthru
          _
        %324 = shalt.err (0)
        %s326 = sshll.u32 %s318, 4
        %s327 = int_to_ptr.vmem [resolvable:$true] %s326
        %329 = dma.hbm_to_vmem [thread:$0]  %s317, 16, %s327, %s84
        %s330 = sadd.s32 %s58, 7
        %s331 = sld [smem:[#allocation6 + %s330]]
        %p332 = scmp.gt.s32.totalorder %s331, 0
        %s333 = scalar_select %p332, %s331, 0
        %p334 = scmp.lt.s32.totalorder %s333, 255
        %s335 = scalar_select %p334, %s333, 255
        %s336 = sld [smem:[#allocation7 + %s330]]
        %p337 = scmp.gt.s32.totalorder %s336, 0
        %s338 = scalar_select %p337, %s336, 0
        %p339 = scmp.lt.s32.totalorder %s338, 63
        %s340 = scalar_select %p339, %s338, 63
        %s341 = smul.addr %s335, 16
        %s342 = scalar_lea.hbm %s2, %s341
        %s343 = scalar_lea.vmem [#allocation2], 7
        // Predicated region
        $region69: #{tpu_custom_call.1} parent=11 // pred_check
          _
        $region70: #{tpu_custom_call.1} parent=11 // pred_check_branch
          %345 = sbr.rel target = $region72
        $region71: #{tpu_custom_call.1} parent=11 // pred_region
          %346 = sst [smem:[#allocation12]] [#allocation41]
          %347 = sst [smem:[#allocation13]] [#allocation40]
        $region72: #{tpu_custom_call.1} parent=11 // pred_fallthru
          _
        %349 = shalt.err (0)
        %s351 = sshll.u32 %s343, 4
        %s352 = int_to_ptr.vmem [resolvable:$true] %s351
        %354 = dma.hbm_to_vmem [thread:$0]  %s342, 16, %s352, [#allocation4]
        %s355 = smul.addr %s340, 16
        %s356 = scalar_lea.hbm %s3, %s355
        %s357 = scalar_lea.vmem [#allocation3], 7
        // Predicated region
        $region73: #{tpu_custom_call.1} parent=11 // pred_check
          _
        $region74: #{tpu_custom_call.1} parent=11 // pred_check_branch
          %359 = sbr.rel target = $region76
        $region75: #{tpu_custom_call.1} parent=11 // pred_region
          %360 = sst [smem:[#allocation12]] [#allocation43]
          %361 = sst [smem:[#allocation13]] [#allocation42]
        $region76: #{tpu_custom_call.1} parent=11 // pred_fallthru
          _
        %363 = shalt.err (0)
        %s365 = sshll.u32 %s357, 4
        %s366 = int_to_ptr.vmem [resolvable:$true] %s365
        %368 = dma.hbm_to_vmem [thread:$0]  %s356, 16, %s366, %s84
        %370 = dma.done [#allocation4], 16
        %372 = dma.done %s84, 16
        %374 = dma.done [#allocation4], 16
        %376 = dma.done %s84, 16
        %378 = dma.done [#allocation4], 16
        %380 = dma.done %s84, 16
        %382 = dma.done [#allocation4], 16
        %384 = dma.done %s84, 16
        %386 = dma.done [#allocation4], 16
        %388 = dma.done %s84, 16
        %390 = dma.done [#allocation4], 16
        %392 = dma.done %s84, 16
        %394 = dma.done [#allocation4], 16
        %396 = dma.done %s84, 16
        %398 = dma.done [#allocation4], 16
        %400 = dma.done %s84, 16
        %v401 = vld [vmem:[#allocation2] sm:$0xff]
        %v402 = vld [vmem:[#allocation3] sm:$0xff]
        %v403 = vadd.f32 %v401, %v402
        %404 = vst [vmem:[%s57] sm:$0xff] %v403
        %s405 = sand.u32 %s30, 1
        %s406 = scalar_lea.sflag [#allocation9], %s405
        %s407 = sand.u32 %s30, 1
        %s408 = smul.addr %s407, 8
        %s409 = scalar_lea.vmem [#allocation8], %s408
        // Predicated region
        $region77: #{tpu_custom_call.1} parent=11 // pred_check
          %p410 = pneg %p36
        $region78: #{tpu_custom_call.1} parent=11 // pred_check_branch
          %412 = sbr.rel (%p410) target = $region80
        $region79: #{tpu_custom_call.1} parent=11 // pred_region
          %s414 = ssub.s32 128, 128
          %415 = vsyncadd %s406, %s414
          %s416 = smul.addr %s21, 128
          %s417 = scalar_lea.hbm %s4, %s416
          %s419 = sshll.u32 %s409, 4
          %s420 = int_to_ptr.vmem [resolvable:$true] %s419
          %422 = dma.vmem_to_hbm [thread:$0]  %s420, 128, %s417, %s406
        $region80: #{tpu_custom_call.1} parent=11 // pred_fallthru
          _
      $region12: #{tpu_custom_call.1} parent=5 // pred_fallthru
        _
      %p423 = scmp.le.s32.totalorder 1, %s21
      // Predicated region
      $region81: #{tpu_custom_call.1} parent=5 // pred_check
        %p424 = pneg %p423
      $region82: #{tpu_custom_call.1} parent=5 // pred_check_branch
        %426 = sbr.rel (%p424) target = $region84
      $region83: #{tpu_custom_call.1} parent=5 // pred_region
        %s427 = ssub.s32 %s21, 1
        // Predicated region
        $region85: #{tpu_custom_call.1} parent=83 // pred_check
          %p428 = pneg %p42
        $region86: #{tpu_custom_call.1} parent=83 // pred_check_branch
          %430 = sbr.rel (%p428) target = $region88
        $region87: #{tpu_custom_call.1} parent=83 // pred_region
          %s431 = sand.u32 %s33, 1
          %s432 = scalar_lea.sflag [#allocation9], %s431
          %s433 = sand.u32 %s33, 1
          %s434 = smul.addr %s433, 8
          %s435 = scalar_lea.vmem [#allocation8], %s434
          %436 = dma.done %s432, 128
        $region88: #{tpu_custom_call.1} parent=83 // pred_fallthru
          _
      $region84: #{tpu_custom_call.1} parent=5 // pred_fallthru
        _
    $region6: #{tpu_custom_call.1} parent=1 // loop_footer
      %s25 = sadd.s32 1, %s21
    $region7: #{tpu_custom_call.1} parent=1 // loop_footer_branch
      %20 = sbr.rel target = $region3
    $region8: #{tpu_custom_call.1} parent=1 // loop_exit
      _
    %437 = vsyncpa [#allocation9], 1
    %s438 = scalar_lea.sflag [#allocation9], 1
    %439 = vsyncpa %s438, 1
  %440 = vsyncmov [#allocation4]
  %s441 = vpop.sfrf %440
  %p442 = scmp.eq.s32.totalorder %s441, 0
  %p443 = pneg %p442
  %445 = shalt.err (%p443)
  %s446 = scalar_lea.sflag [#allocation4], 1
  %447 = vsyncmov %s446
  %s448 = vpop.sfrf %447
  %p449 = scmp.eq.s32.totalorder %s448, 0
  %p450 = pneg %p449
  %452 = shalt.err (%p450)

</llo_original>
